<compile_context>
chip_gen: v5e
topology: v5e:2x2
jax: 0.10.0
libtpu: 0.0.40
codegen_flags: <defaults>
</compile_context>

<pallas_src>
import functools

import jax
import jax.numpy as jnp
from jax.experimental import pallas as pl
from jax.experimental.pallas import tpu as pltpu


# ----------------------------- tiling helper -------------------------------

def _pick_tile(dim, target, align):
    """Largest tile <= target that evenly divides dim (full dim if small)."""
    if dim <= target:
        return dim
    t = (target // align) * align
    while t >= align:
        if dim % t == 0:
            return t
        t -= align
    return dim


# ----------------------------- Pallas kernels ------------------------------

def _matmul_bias_kernel(x_ref, w_ref, b_ref, o_ref, acc_ref, *, activation):
    """Tiled matmul, K-accumulated; optional GELU epilogue."""
    k = pl.program_id(2)

    @pl.when(k == 0)
    def _():
        acc_ref[...] = jnp.zeros_like(acc_ref)

    acc_ref[...] += jnp.dot(x_ref[...], w_ref[...],
                            preferred_element_type=jnp.float32)

    @pl.when(k == pl.num_programs(2) - 1)
    def _():
        y = acc_ref[...] + b_ref[...]
        if activation == "gelu":
            # tanh-approx GELU (HF RoBERTa uses erf GELU; difference is tiny).
            y = jax.nn.gelu(y, approximate=True)
        o_ref[...] = y.astype(o_ref.dtype)


def _matmul_res_ln_kernel(x_ref, w_ref, b_ref, res_ref, g_ref, bt_ref,
                          o_ref, acc_ref, *, eps):
    """Tiled matmul + bias + residual + LayerNorm fused epilogue (f32 stats)."""
    k = pl.program_id(1)

    @pl.when(k == 0)
    def _():
        acc_ref[...] = jnp.zeros_like(acc_ref)

    acc_ref[...] += jnp.dot(x_ref[...], w_ref[...],
                            preferred_element_type=jnp.float32)

    @pl.when(k == pl.num_programs(1) - 1)
    def _():
        y = acc_ref[...] + b_ref[...] + res_ref[...].astype(jnp.float32)
        mu = jnp.mean(y, axis=-1, keepdims=True)
        var = jnp.mean(jnp.square(y - mu), axis=-1, keepdims=True)
        o_ref[...] = ((y - mu) * jax.lax.rsqrt(var + eps)
                      * g_ref[...] + bt_ref[...]).astype(o_ref.dtype)


def _embed_ln_kernel(w_ref, pt_ref, g_ref, b_ref, o_ref, *, eps):
    """(word_emb + pos_emb + type_emb) fused with LayerNorm; f32 statistics."""
    x = w_ref[0].astype(jnp.float32) + pt_ref[...]
    mu = jnp.mean(x, axis=-1, keepdims=True)
    var = jnp.mean(jnp.square(x - mu), axis=-1, keepdims=True)
    o_ref[0] = ((x - mu) * jax.lax.rsqrt(var + eps)
                * g_ref[...] + b_ref[...]).astype(o_ref.dtype)


def _attn_kernel(q_ref, k_ref, v_ref, bias_ref, o_ref, *, hpb, dh, scale):
    """MHA over one (batch, head-group) tile; softmax in f32, exact divide.

    q_ref/k_ref/v_ref blocks: (1, hpb, S, dh); o_ref block: (1, S, hpb*dh).
    The hpb inner loop is tiny (2 heads for dh=64), so live ranges stay
    bounded; the single concatenated store is lane-dense (hpb*dh >= 128 or
    full H).
    """
    bias = bias_ref[0]                     # (1, S) f32 additive mask bias
    outs = []
    for h in range(hpb):                   # hpb is small (usually 2)
        q = q_ref[0, h] * scale            # scale Q (S*dh mults, not S*S)
        k = k_ref[0, h]
        v = v_ref[0, h]
        # q @ k^T without materializing a transpose.
        s = jax.lax.dot_general(q, k, (((1,), (1,)), ((), ())),
                                preferred_element_type=jnp.float32)
        s = s + bias
        s = s - jnp.max(s, axis=-1, keepdims=True)
        p = jnp.exp(s)
        p = p / jnp.sum(p, axis=-1, keepdims=True)          # exact softmax
        # NOTE: ctx matmul has N=dh (<=64) -> MXU underfilled on v6e/v7x;
        # accepted since the dense projections / FFN dominate FLOPs.
        ctx = jnp.dot(p.astype(v.dtype), v,
                      preferred_element_type=jnp.float32)
        outs.append(ctx)
    o_ref[0] = jnp.concatenate(outs, axis=-1).astype(o_ref.dtype)


# ----------------------------- kernel wrappers ------------------------------

def dense(x, w, b, *, activation=None, out_dtype=jnp.bfloat16,
          tm=256, tn=1152, tk=1024):
    """x: (M, K), w: (K, N), b: (N,) -> (M, N).  bf16 MXU, f32 accumulate.

    Defaults chosen so K=768 collapses to one K step, K=3072 to three, and
    N=2304 (QKV) tiles at 1152 / N=3072 (FFN) at 1024 (never 384).
    """
    M, K = x.shape
    N = w.shape[1]
    tm = _pick_tile(M, tm, 16)
    tn = _pick_tile(N, tn, 128)
    tk = _pick_tile(K, tk, 128)
    grid = (M // tm, N // tn, K // tk)
    return pl.pallas_call(
        functools.partial(_matmul_bias_kernel, activation=activation),
        out_shape=jax.ShapeDtypeStruct((M, N), out_dtype),
        grid=grid,
        in_specs=[pl.BlockSpec((tm, tk), lambda i, j, k: (i, k)),
                  pl.BlockSpec((tk, tn), lambda i, j, k: (k, j)),
                  pl.BlockSpec((1, tn), lambda i, j, k: (0, j))],
        out_specs=pl.BlockSpec((tm, tn), lambda i, j, k: (i, j)),
        scratch_shapes=[pltpu.VMEM((tm, tn), jnp.float32)],
        compiler_params=pltpu.CompilerParams(
            dimension_semantics=("parallel", "parallel", "arbitrary")),
    )(x.astype(jnp.bfloat16), w.astype(jnp.bfloat16),
      b.astype(jnp.float32).reshape(1, N))


def dense_residual_ln(x, w, b, residual, gamma, beta, *, eps=1e-5,
                      out_dtype=jnp.bfloat16, tm=256, tk=1024):
    """LayerNorm((x @ w + b) + residual); LN needs full N (= H) per tile."""
    M, K = x.shape
    N = w.shape[1]
    tm = _pick_tile(M, tm, 16)
    tk = _pick_tile(K, tk, 128)
    grid = (M // tm, K // tk)
    return pl.pallas_call(
        functools.partial(_matmul_res_ln_kernel, eps=eps),
        out_shape=jax.ShapeDtypeStruct((M, N), out_dtype),
        grid=grid,
        in_specs=[pl.BlockSpec((tm, tk), lambda i, k: (i, k)),
                  pl.BlockSpec((tk, N), lambda i, k: (k, 0)),
                  pl.BlockSpec((1, N), lambda i, k: (0, 0)),
                  pl.BlockSpec((tm, N), lambda i, k: (i, 0)),
                  pl.BlockSpec((1, N), lambda i, k: (0, 0)),
                  pl.BlockSpec((1, N), lambda i, k: (0, 0))],
        out_specs=pl.BlockSpec((tm, N), lambda i, k: (i, 0)),
        scratch_shapes=[pltpu.VMEM((tm, N), jnp.float32)],
        compiler_params=pltpu.CompilerParams(
            dimension_semantics=("parallel", "arbitrary")),
    )(x.astype(jnp.bfloat16), w.astype(jnp.bfloat16),
      b.astype(jnp.float32).reshape(1, N),
      residual.astype(jnp.bfloat16),
      gamma.astype(jnp.float32).reshape(1, N),
      beta.astype(jnp.float32).reshape(1, N))


def embed_ln(word_emb, pos_type, gamma, beta, *, eps=1e-5,
             out_dtype=jnp.bfloat16, ts=256):
    """LayerNorm(word_emb + pos_type) fused; word_emb: (B,S,H) bf16."""
    B, S, H = word_emb.shape
    ts = _pick_tile(S, ts, 8)
    return pl.pallas_call(
        functools.partial(_embed_ln_kernel, eps=eps),
        out_shape=jax.ShapeDtypeStruct((B, S, H), out_dtype),
        grid=(B, S // ts),
        in_specs=[pl.BlockSpec((1, ts, H), lambda b, s: (b, s, 0)),
                  pl.BlockSpec((ts, H), lambda b, s: (s, 0)),
                  pl.BlockSpec((1, H), lambda b, s: (0, 0)),
                  pl.BlockSpec((1, H), lambda b, s: (0, 0))],
        out_specs=pl.BlockSpec((1, ts, H), lambda b, s: (b, s, 0)),
        compiler_params=pltpu.CompilerParams(
            dimension_semantics=("parallel", "parallel")),
    )(word_emb, pos_type.astype(jnp.float32),
      gamma.astype(jnp.float32).reshape(1, H),
      beta.astype(jnp.float32).reshape(1, H))


def attention(q, k, v, bias, *, nh, dh):
    """q/k/v: (B, nh, S, dh) bf16; bias: (B, 1, S) f32 -> (B, S, H) bf16.

    Grid = (batch, head-group).  Head-group size hpb is chosen so the output
    store width hpb*dh is lane-dense (128 for dh=64) or the full H for tiny
    heads; the store lands directly in (B, S, H) layout (no wrapper
    transpose of the context).
    """
    B, _, S, _ = q.shape
    H = nh * dh
    if dh % 128 == 0:
        hpb = 1
    elif 128 % dh == 0 and nh % (128 // dh) == 0:
        hpb = 128 // dh
    else:
        hpb = nh
    scale = float(dh) ** -0.5
    grid = (B, nh // hpb)
    qkv_spec = pl.BlockSpec((1, hpb, S, dh), lambda b, g: (b, g, 0, 0))
    return pl.pallas_call(
        functools.partial(_attn_kernel, hpb=hpb, dh=dh, scale=scale),
        out_shape=jax.ShapeDtypeStruct((B, S, H), jnp.bfloat16),
        grid=grid,
        in_specs=[qkv_spec, qkv_spec, qkv_spec,
                  pl.BlockSpec((1, 1, S), lambda b, g: (b, 0, 0))],
        out_specs=pl.BlockSpec((1, S, hpb * dh), lambda b, g: (b, 0, g)),
        compiler_params=pltpu.CompilerParams(
            dimension_semantics=("parallel", "parallel")),
    )(q, k, v, bias)


# ----------------------------- model (glue) --------------------------------

def encoder_layer(h2d, bias, lp, B, S, H, nh):
    dh = H // nh
    # Fused QKV projection: one (B*S, H) x (H, 3H) matmul.
    qkv = dense(h2d, lp["wqkv"], lp["bqkv"])                      # (B*S, 3H)
    # Relayout to (3, B, nh, S, dh) so the attention BlockSpecs deliver
    # contiguous per-head tiles (review item 1).
    qkv = qkv.reshape(B, S, 3, nh, dh).transpose(2, 0, 3, 1, 4)
    ctx = attention(qkv[0], qkv[1], qkv[2], bias, nh=nh, dh=dh)   # (B, S, H)
    # Attention output projection + residual + LN1 (fused epilogue).
    h1 = dense_residual_ln(ctx.reshape(B * S, H), lp["wo"], lp["bo"],
                           h2d, lp["ln1_g"], lp["ln1_b"])
    # FFN: GELU matmul, then second matmul + residual + LN2 (fused epilogue).
    ffn = dense(h1, lp["wi"], lp["bi"], activation="gelu")
    h2 = dense_residual_ln(ffn, lp["wo2"], lp["bo2"],
                           h1, lp["ln2_g"], lp["ln2_b"])
    return h2                                                      # (B*S, H)


def model_forward(params, input_ids, attention_mask, nh):
    B, S = input_ids.shape
    H = params["word_emb"].shape[1]

    # Embeddings: gather in plain JAX, cast to bf16, pos/type adds + LayerNorm
    # fused in one Pallas kernel (no f32 (B,S,H) HBM round trip).
    word = jnp.take(params["word_emb"], input_ids, axis=0).astype(jnp.bfloat16)
    pos_type = params["pos_emb"][:S] + params["type_emb"][0][None, :]   # (S,H)
    h = embed_ln(word, pos_type,
                 params["emb_ln_g"], params["emb_ln_b"]).reshape(B * S, H)

    # Additive attention-mask bias built once, reused by every layer.
    bias = ((1.0 - attention_mask.astype(jnp.float32)) * -1e9).reshape(B, 1, S)

    hidden_states = [h]                       # matches output_hidden_states=True
    for lp in params["layers"]:
        h = encoder_layer(h, bias, lp, B, S, H, nh)
        hidden_states.append(h)

    # Slice first token BEFORE concatenating (avoids S-times-larger concat).
    # Concat order [-1, -2, -3, -4] per the reference module.
    first_token = jnp.concatenate(
        [hidden_states[i].reshape(B, S, H)[:, 0, :] for i in (-1, -2, -3, -4)],
        axis=-1)                                                     # (B, 4H)

    # Regressor Linear(4H -> 1): tiny matmul, plain XLA (Pallas grid overhead
    # would dominate it).
    out = first_token.astype(jnp.float32) @ params["reg_w"] + params["reg_b"]
    return out                                                        # (B, 1)


# --------------------------- deterministic init -----------------------------

def init_params(key, *, vocab, H, nh, inter, num_layers, max_seq):
    del nh
    keys = iter(jax.random.split(key, 8 + 8 * num_layers))

    def nrm(shape, std=0.02):
        return jax.random.normal(next(keys), shape, jnp.float32) * std

    params = {
        "word_emb": nrm((vocab, H)),
        "pos_emb": nrm((max_seq, H)),
        "type_emb": nrm((1, H)),
        "emb_ln_g": jnp.ones((H,), jnp.float32),
        "emb_ln_b": jnp.zeros((H,), jnp.float32),
        "layers": [],
        "reg_w": nrm((4 * H, 1)),
        "reg_b": jnp.zeros((1,), jnp.float32),
    }
    for _ in range(num_layers):
        params["layers"].append({
            # fused QKV weight (wq | wk | wv), stored bf16 for the MXU.
            "wqkv": nrm((H, 3 * H)).astype(jnp.bfloat16),
            "bqkv": jnp.zeros((3 * H,), jnp.float32),
            "wo": nrm((H, H)).astype(jnp.bfloat16),
            "bo": jnp.zeros((H,), jnp.float32),
            "ln1_g": jnp.ones((H,), jnp.float32),
            "ln1_b": jnp.zeros((H,), jnp.float32),
            "wi": nrm((H, inter)).astype(jnp.bfloat16),
            "bi": jnp.zeros((inter,), jnp.float32),
            "wo2": nrm((inter, H)).astype(jnp.bfloat16),
            "bo2": jnp.zeros((H,), jnp.float32),
            "ln2_g": jnp.ones((H,), jnp.float32),
            "ln2_b": jnp.zeros((H,), jnp.float32),
        })
    return params


if __name__ == "__main__":
    # Small shapes consistent with the module's forward (roberta-base scaled down).
    B, S, H, NH, INTER, LAYERS, VOCAB = 2, 8, 32, 4, 64, 4, 100

    key = jax.random.PRNGKey(0)
    pkey, ikey = jax.random.split(key)
    params = init_params(pkey, vocab=VOCAB, H=H, nh=NH, inter=INTER,
                         num_layers=LAYERS, max_seq=S)

    input_ids = jax.random.randint(ikey, (B, S), 0, VOCAB, dtype=jnp.int32)
    attention_mask = jnp.ones((B, S), dtype=jnp.int32)
    attention_mask = attention_mask.at[1, 6:].set(0)   # pad tail of 2nd example

    fwd = jax.jit(model_forward, static_argnums=(3,))
    out = jax.block_until_ready(fwd(params, input_ids, attention_mask, NH))
    assert out.shape == (B, 1) and out.dtype == jnp.float32
    print("KERNEL_OK")
</pallas_src>

<mosaic_0001>
module attributes {stable_mosaic.version = 11 : i64} {
  func.func @_embed_ln_kernel(%arg0: i32, %arg1: i32, %arg2: memref<1x8x32xbf16, #tpu.memory_space<vmem>>, %arg3: memref<8x32xf32, #tpu.memory_space<vmem>>, %arg4: memref<1x32xf32, #tpu.memory_space<vmem>>, %arg5: memref<1x32xf32, #tpu.memory_space<vmem>>, %arg6: memref<1x8x32xbf16, #tpu.memory_space<vmem>>) attributes {dimension_semantics = [#tpu.dimension_semantics<parallel>, #tpu.dimension_semantics<parallel>], iteration_bounds = array<i64: 2, 1>, scalar_prefetch = 0 : i64, scratch_operands = 0 : i64, tpu.core_type = #tpu.core_type<tc>, window_params = [{transform_indices = @transform_0, window_bounds = array<i64: 1, 8, 32>}, {transform_indices = @transform_1, window_bounds = array<i64: 8, 32>}, {pipeline_mode = #tpu.pipeline_mode<synchronous>, transform_indices = @transform_2, window_bounds = array<i64: 1, 32>}, {pipeline_mode = #tpu.pipeline_mode<synchronous>, transform_indices = @transform_3, window_bounds = array<i64: 1, 32>}, {transform_indices = @transform_4, window_bounds = array<i64: 1, 8, 32>}]} {
    %c0 = arith.constant 0 : index
    %c0_0 = arith.constant 0 : index
    %c0_1 = arith.constant 0 : index
    %0 = vector.load %arg2[%c0, %c0_0, %c0_1] : memref<1x8x32xbf16, #tpu.memory_space<vmem>>, vector<1x8x32xbf16>
    %1 = vector.shape_cast %0 : vector<1x8x32xbf16> to vector<8x32xbf16>
    %2 = arith.extf %1 : vector<8x32xbf16> to vector<8x32xf32>
    %c0_2 = arith.constant 0 : index
    %c0_3 = arith.constant 0 : index
    %3 = vector.load %arg3[%c0_2, %c0_3] : memref<8x32xf32, #tpu.memory_space<vmem>>, vector<8x32xf32>
    %4 = arith.addf %2, %3 : vector<8x32xf32>
    %cst = arith.constant dense<0.000000e+00> : vector<8xf32>
    %5 = vector.multi_reduction <add>, %4, %cst [1] : vector<8x32xf32> to vector<8xf32>
    %6 = vector.shape_cast %5 : vector<8xf32> to vector<8x1xf32>
    %cst_4 = arith.constant 3.200000e+01 : f32
    %7 = vector.broadcast %cst_4 : f32 to vector<8x1xf32>
    %8 = arith.divf %6, %7 : vector<8x1xf32>
    %9 = vector.broadcast %8 : vector<8x1xf32> to vector<8x32xf32>
    %10 = arith.subf %4, %9 : vector<8x32xf32>
    %11 = arith.mulf %10, %10 : vector<8x32xf32>
    %cst_5 = arith.constant dense<0.000000e+00> : vector<8xf32>
    %12 = vector.multi_reduction <add>, %11, %cst_5 [1] : vector<8x32xf32> to vector<8xf32>
    %13 = vector.shape_cast %12 : vector<8xf32> to vector<8x1xf32>
    %cst_6 = arith.constant 3.200000e+01 : f32
    %14 = vector.broadcast %cst_6 : f32 to vector<8x1xf32>
    %15 = arith.divf %13, %14 : vector<8x1xf32>
    %16 = vector.broadcast %8 : vector<8x1xf32> to vector<8x32xf32>
    %17 = arith.subf %4, %16 : vector<8x32xf32>
    %cst_7 = arith.constant 9.99999974E-6 : f32
    %18 = vector.broadcast %cst_7 : f32 to vector<8x1xf32>
    %19 = arith.addf %15, %18 : vector<8x1xf32>
    %20 = math.rsqrt %19 : vector<8x1xf32>
    %21 = vector.broadcast %20 : vector<8x1xf32> to vector<8x32xf32>
    %22 = arith.mulf %17, %21 : vector<8x32xf32>
    %c0_8 = arith.constant 0 : index
    %c0_9 = arith.constant 0 : index
    %23 = vector.load %arg4[%c0_8, %c0_9] : memref<1x32xf32, #tpu.memory_space<vmem>>, vector<1x32xf32>
    %24 = vector.broadcast %23 : vector<1x32xf32> to vector<8x32xf32>
    %25 = arith.mulf %22, %24 : vector<8x32xf32>
    %c0_10 = arith.constant 0 : index
    %c0_11 = arith.constant 0 : index
    %26 = vector.load %arg5[%c0_10, %c0_11] : memref<1x32xf32, #tpu.memory_space<vmem>>, vector<1x32xf32>
    %27 = vector.broadcast %26 : vector<1x32xf32> to vector<8x32xf32>
    %28 = arith.addf %25, %27 : vector<8x32xf32>
    %29 = arith.truncf %28 : vector<8x32xf32> to vector<8x32xbf16>
    %c0_12 = arith.constant 0 : index
    %c0_13 = arith.constant 0 : index
    %c0_14 = arith.constant 0 : index
    %30 = vector.load %arg6[%c0_12, %c0_13, %c0_14] : memref<1x8x32xbf16, #tpu.memory_space<vmem>>, vector<1x8x32xbf16>
    %31 = vector.shape_cast %30 : vector<1x8x32xbf16> to vector<8x32xbf16>
    %32 = vector.shape_cast %29 : vector<8x32xbf16> to vector<1x8x32xbf16>
    tpu.vector_store %arg6[%c0_12, %c0_13, %c0_14], %32 {strides = array<i32>} : memref<1x8x32xbf16, #tpu.memory_space<vmem>>, vector<1x8x32xbf16>,
    return
  }
  func.func @transform_0(%arg0: i32, %arg1: i32) -> (i32, i32, i32) {
    %c0_i32 = arith.constant 0 : i32
    %c0_i32_0 = arith.constant 0 : i32
    return %arg0, %arg1, %c0_i32 : i32, i32, i32
  }
  func.func @transform_1(%arg0: i32, %arg1: i32) -> (i32, i32) {
    %c0_i32 = arith.constant 0 : i32
    %c0_i32_0 = arith.constant 0 : i32
    return %arg1, %c0_i32 : i32, i32
  }
  func.func @transform_2(%arg0: i32, %arg1: i32) -> (i32, i32) {
    %c0_i32 = arith.constant 0 : i32
    %c0_i32_0 = arith.constant 0 : i32
    %c0_i32_1 = arith.constant 0 : i32
    return %c0_i32, %c0_i32_0 : i32, i32
  }
  func.func @transform_3(%arg0: i32, %arg1: i32) -> (i32, i32) {
    %c0_i32 = arith.constant 0 : i32
    %c0_i32_0 = arith.constant 0 : i32
    %c0_i32_1 = arith.constant 0 : i32
    return %c0_i32, %c0_i32_0 : i32, i32
  }
  func.func @transform_4(%arg0: i32, %arg1: i32) -> (i32, i32, i32) {
    %c0_i32 = arith.constant 0 : i32
    %c0_i32_0 = arith.constant 0 : i32
    return %arg0, %arg1, %c0_i32 : i32, i32, i32
  }
}

module attributes {stable_mosaic.version = 11 : i64} {
  func.func @_matmul_bias_kernel(%arg0: i32, %arg1: i32, %arg2: i32, %arg3: memref<16x32xbf16, #tpu.memory_space<vmem>>, %arg4: memref<32x96xbf16, #tpu.memory_space<vmem>>, %arg5: memref<1x96xf32, #tpu.memory_space<vmem>>, %arg6: memref<16x96xbf16, #tpu.memory_space<vmem>>, %arg7: memref<16x96xf32, #tpu.memory_space<vmem>>) attributes {dimension_semantics = [#tpu.dimension_semantics<parallel>, #tpu.dimension_semantics<parallel>, #tpu.dimension_semantics<arbitrary>], iteration_bounds = array<i64: 1, 1, 1>, scalar_prefetch = 0 : i64, scratch_operands = 1 : i64, tpu.core_type = #tpu.core_type<tc>, window_params = [{transform_indices = @transform_0, window_bounds = array<i64: 16, 32>}, {transform_indices = @transform_1, window_bounds = array<i64: 32, 96>}, {transform_indices = @transform_2, window_bounds = array<i64: 1, 96>}, {transform_indices = @transform_3, window_bounds = array<i64: 16, 96>}]} {
    %c0_i32 = arith.constant 0 : i32
    %0 = arith.cmpi eq, %arg2, %c0_i32 : i32
    %1 = arith.extui %0 : i1 to i32
    %c0_i32_0 = arith.constant 0 : i32
    %2 = arith.cmpi ne, %1, %c0_i32_0 : i32
    scf.if %2 {
      %cst_10 = arith.constant 0.000000e+00 : f32
      %12 = vector.broadcast %cst_10 : f32 to vector<16x96xf32>
      %c0_11 = arith.constant 0 : index
      %c0_12 = arith.constant 0 : index
      %13 = vector.load %arg7[%c0_11, %c0_12] : memref<16x96xf32, #tpu.memory_space<vmem>>, vector<16x96xf32>
      tpu.vector_store %arg7[%c0_11, %c0_12], %12 {strides = array<i32>} : memref<16x96xf32, #tpu.memory_space<vmem>>, vector<16x96xf32>,
    } else {
    }
    %c0 = arith.constant 0 : index
    %c0_1 = arith.constant 0 : index
    %3 = vector.load %arg7[%c0, %c0_1] : memref<16x96xf32, #tpu.memory_space<vmem>>, vector<16x96xf32>
    %c0_2 = arith.constant 0 : index
    %c0_3 = arith.constant 0 : index
    %4 = vector.load %arg3[%c0_2, %c0_3] : memref<16x32xbf16, #tpu.memory_space<vmem>>, vector<16x32xbf16>
    %c0_4 = arith.constant 0 : index
    %c0_5 = arith.constant 0 : index
    %5 = vector.load %arg4[%c0_4, %c0_5] : memref<32x96xbf16, #tpu.memory_space<vmem>>, vector<32x96xbf16>
    %cst = arith.constant dense<0.000000e+00> : vector<16x96xf32>
    %6 = tpu.matmul %4, %5, %cst {dimension_numbers = #tpu.dot_dimension_numbers<[1], [0], [0], [1], [0, 0, 1, 1], [], []>} : vector<16x32xbf16>, vector<32x96xbf16>, vector<16x96xf32> -> vector<16x96xf32>
    %7 = arith.addf %3, %6 : vector<16x96xf32>
    %c0_6 = arith.constant 0 : index
    %c0_7 = arith.constant 0 : index
    %8 = vector.load %arg7[%c0_6, %c0_7] : memref<16x96xf32, #tpu.memory_space<vmem>>, vector<16x96xf32>
    tpu.vector_store %arg7[%c0_6, %c0_7], %7 {strides = array<i32>} : memref<16x96xf32, #tpu.memory_space<vmem>>, vector<16x96xf32>,
    %c0_i32_8 = arith.constant 0 : i32
    %9 = arith.cmpi eq, %arg2, %c0_i32_8 : i32
    %10 = arith.extui %9 : i1 to i32
    %c0_i32_9 = arith.constant 0 : i32
    %11 = arith.cmpi ne, %10, %c0_i32_9 : i32
    scf.if %11 {
      %c0_10 = arith.constant 0 : index
      %c0_11 = arith.constant 0 : index
      %12 = vector.load %arg7[%c0_10, %c0_11] : memref<16x96xf32, #tpu.memory_space<vmem>>, vector<16x96xf32>
      %c0_12 = arith.constant 0 : index
      %c0_13 = arith.constant 0 : index
      %13 = vector.load %arg5[%c0_12, %c0_13] : memref<1x96xf32, #tpu.memory_space<vmem>>, vector<1x96xf32>
      %14 = vector.broadcast %13 : vector<1x96xf32> to vector<16x96xf32>
      %15 = arith.addf %12, %14 : vector<16x96xf32>
      %16 = arith.truncf %15 : vector<16x96xf32> to vector<16x96xbf16>
      %c0_14 = arith.constant 0 : index
      %c0_15 = arith.constant 0 : index
      %17 = vector.load %arg6[%c0_14, %c0_15] : memref<16x96xbf16, #tpu.memory_space<vmem>>, vector<16x96xbf16>
      tpu.vector_store %arg6[%c0_14, %c0_15], %16 {strides = array<i32>} : memref<16x96xbf16, #tpu.memory_space<vmem>>, vector<16x96xbf16>,
    } else {
    }
    return
  }
  func.func @transform_0(%arg0: i32, %arg1: i32, %arg2: i32) -> (i32, i32) {
    %c0_i32 = arith.constant 0 : i32
    return %arg0, %arg2 : i32, i32
  }
  func.func @transform_1(%arg0: i32, %arg1: i32, %arg2: i32) -> (i32, i32) {
    %c0_i32 = arith.constant 0 : i32
    return %arg2, %arg1 : i32, i32
  }
  func.func @transform_2(%arg0: i32, %arg1: i32, %arg2: i32) -> (i32, i32) {
    %c0_i32 = arith.constant 0 : i32
    %c0_i32_0 = arith.constant 0 : i32
    return %c0_i32, %arg1 : i32, i32
  }
  func.func @transform_3(%arg0: i32, %arg1: i32, %arg2: i32) -> (i32, i32) {
    %c0_i32 = arith.constant 0 : i32
    return %arg0, %arg1 : i32, i32
  }
}

module attributes {stable_mosaic.version = 11 : i64} {
  func.func @_attn_kernel(%arg0: i32, %arg1: i32, %arg2: memref<1x4x8x8xbf16, #tpu.memory_space<vmem>>, %arg3: memref<1x4x8x8xbf16, #tpu.memory_space<vmem>>, %arg4: memref<1x4x8x8xbf16, #tpu.memory_space<vmem>>, %arg5: memref<1x1x8xf32, #tpu.memory_space<vmem>>, %arg6: memref<1x8x32xbf16, #tpu.memory_space<vmem>>) attributes {dimension_semantics = [#tpu.dimension_semantics<parallel>, #tpu.dimension_semantics<parallel>], iteration_bounds = array<i64: 2, 1>, scalar_prefetch = 0 : i64, scratch_operands = 0 : i64, tpu.core_type = #tpu.core_type<tc>, window_params = [{transform_indices = @transform_0, window_bounds = array<i64: 1, 4, 8, 8>}, {transform_indices = @transform_1, window_bounds = array<i64: 1, 4, 8, 8>}, {transform_indices = @transform_2, window_bounds = array<i64: 1, 4, 8, 8>}, {transform_indices = @transform_3, window_bounds = array<i64: 1, 1, 8>}, {transform_indices = @transform_4, window_bounds = array<i64: 1, 8, 32>}]} {
    %c0 = arith.constant 0 : index
    %c0_0 = arith.constant 0 : index
    %c0_1 = arith.constant 0 : index
    %0 = vector.load %arg5[%c0, %c0_0, %c0_1] : memref<1x1x8xf32, #tpu.memory_space<vmem>>, vector<1x1x8xf32>
    %1 = vector.shape_cast %0 : vector<1x1x8xf32> to vector<1x8xf32>
    %c0_2 = arith.constant 0 : index
    %c0_3 = arith.constant 0 : index
    %c0_4 = arith.constant 0 : index
    %c0_5 = arith.constant 0 : index
    %2 = vector.load %arg2[%c0_2, %c0_3, %c0_4, %c0_5] : memref<1x4x8x8xbf16, #tpu.memory_space<vmem>>, vector<1x1x8x8xbf16>
    %3 = vector.shape_cast %2 : vector<1x1x8x8xbf16> to vector<8x8xbf16>
    %cst = arith.constant 3.535160e-01 : bf16
    %4 = vector.broadcast %cst : bf16 to vector<8x8xbf16>
    %5 = arith.mulf %3, %4 : vector<8x8xbf16>
    %c0_6 = arith.constant 0 : index
    %c0_7 = arith.constant 0 : index
    %c0_8 = arith.constant 0 : index
    %c0_9 = arith.constant 0 : index
    %6 = vector.load %arg3[%c0_6, %c0_7, %c0_8, %c0_9] : memref<1x4x8x8xbf16, #tpu.memory_space<vmem>>, vector<1x1x8x8xbf16>
    %7 = vector.shape_cast %6 : vector<1x1x8x8xbf16> to vector<8x8xbf16>
    %c0_10 = arith.constant 0 : index
    %c0_11 = arith.constant 0 : index
    %c0_12 = arith.constant 0 : index
    %c0_13 = arith.constant 0 : index
    %8 = vector.load %arg4[%c0_10, %c0_11, %c0_12, %c0_13] : memref<1x4x8x8xbf16, #tpu.memory_space<vmem>>, vector<1x1x8x8xbf16>
    %9 = vector.shape_cast %8 : vector<1x1x8x8xbf16> to vector<8x8xbf16>
    %cst_14 = arith.constant dense<0.000000e+00> : vector<8x8xf32>
    %10 = tpu.matmul %5, %7, %cst_14 {dimension_numbers = #tpu.dot_dimension_numbers<[1], [1], [0], [0], [0, 0, 1, 0], [], []>} : vector<8x8xbf16>, vector<8x8xbf16>, vector<8x8xf32> -> vector<8x8xf32>
    %11 = vector.broadcast %1 : vector<1x8xf32> to vector<8x8xf32>
    %12 = arith.addf %10, %11 : vector<8x8xf32>
    %cst_15 = arith.constant dense<0xFF800000> : vector<8xf32>
    %13 = vector.multi_reduction <maximumf>, %12, %cst_15 [1] : vector<8x8xf32> to vector<8xf32>
    %14 = vector.shape_cast %13 : vector<8xf32> to vector<8x1xf32>
    %15 = vector.broadcast %14 : vector<8x1xf32> to vector<8x8xf32>
    %16 = arith.subf %12, %15 : vector<8x8xf32>
    %17 = math.exp %16 : vector<8x8xf32>
    %cst_16 = arith.constant dense<0.000000e+00> : vector<8xf32>
    %18 = vector.multi_reduction <add>, %17, %cst_16 [1] : vector<8x8xf32> to vector<8xf32>
    %19 = vector.shape_cast %18 : vector<8xf32> to vector<8x1xf32>
    %20 = vector.broadcast %19 : vector<8x1xf32> to vector<8x8xf32>
    %21 = arith.divf %17, %20 : vector<8x8xf32>
    %22 = arith.truncf %21 : vector<8x8xf32> to vector<8x8xbf16>
    %cst_17 = arith.constant dense<0.000000e+00> : vector<8x8xf32>
    %23 = tpu.matmul %22, %9, %cst_17 {dimension_numbers = #tpu.dot_dimension_numbers<[1], [0], [0], [1], [0, 0, 1, 1], [], []>} : vector<8x8xbf16>, vector<8x8xbf16>, vector<8x8xf32> -> vector<8x8xf32>
    %c0_18 = arith.constant 0 : index
    %c1 = arith.constant 1 : index
    %c0_19 = arith.constant 0 : index
    %c0_20 = arith.constant 0 : index
    %24 = vector.load %arg2[%c0_18, %c1, %c0_19, %c0_20] : memref<1x4x8x8xbf16, #tpu.memory_space<vmem>>, vector<1x1x8x8xbf16>
    %25 = vector.shape_cast %24 : vector<1x1x8x8xbf16> to vector<8x8xbf16>
    %cst_21 = arith.constant 3.535160e-01 : bf16
    %26 = vector.broadcast %cst_21 : bf16 to vector<8x8xbf16>
    %27 = arith.mulf %25, %26 : vector<8x8xbf16>
    %c0_22 = arith.constant 0 : index
    %c1_23 = arith.constant 1 : index
    %c0_24 = arith.constant 0 : index
    %c0_25 = arith.constant 0 : index
    %28 = vector.load %arg3[%c0_22, %c1_23, %c0_24, %c0_25] : memref<1x4x8x8xbf16, #tpu.memory_space<vmem>>, vector<1x1x8x8xbf16>
    %29 = vector.shape_cast %28 : vector<1x1x8x8xbf16> to vector<8x8xbf16>
    %c0_26 = arith.constant 0 : index
    %c1_27 = arith.constant 1 : index
    %c0_28 = arith.constant 0 : index
    %c0_29 = arith.constant 0 : index
    %30 = vector.load %arg4[%c0_26, %c1_27, %c0_28, %c0_29] : memref<1x4x8x8xbf16, #tpu.memory_space<vmem>>, vector<1x1x8x8xbf16>
    %31 = vector.shape_cast %30 : vector<1x1x8x8xbf16> to vector<8x8xbf16>
    %cst_30 = arith.constant dense<0.000000e+00> : vector<8x8xf32>
    %32 = tpu.matmul %27, %29, %cst_30 {dimension_numbers = #tpu.dot_dimension_numbers<[1], [1], [0], [0], [0, 0, 1, 0], [], []>} : vector<8x8xbf16>, vector<8x8xbf16>, vector<8x8xf32> -> vector<8x8xf32>
    %33 = vector.broadcast %1 : vector<1x8xf32> to vector<8x8xf32>
    %34 = arith.addf %32, %33 : vector<8x8xf32>
    %cst_31 = arith.constant dense<0xFF800000> : vector<8xf32>
    %35 = vector.multi_reduction <maximumf>, %34, %cst_31 [1] : vector<8x8xf32> to vector<8xf32>
    %36 = vector.shape_cast %35 : vector<8xf32> to vector<8x1xf32>
    %37 = vector.broadcast %36 : vector<8x1xf32> to vector<8x8xf32>
    %38 = arith.subf %34, %37 : vector<8x8xf32>
    %39 = math.exp %38 : vector<8x8xf32>
    %cst_32 = arith.constant dense<0.000000e+00> : vector<8xf32>
    %40 = vector.multi_reduction <add>, %39, %cst_32 [1] : vector<8x8xf32> to vector<8xf32>
    %41 = vector.shape_cast %40 : vector<8xf32> to vector<8x1xf32>
    %42 = vector.broadcast %41 : vector<8x1xf32> to vector<8x8xf32>
    %43 = arith.divf %39, %42 : vector<8x8xf32>
    %44 = arith.truncf %43 : vector<8x8xf32> to vector<8x8xbf16>
    %cst_33 = arith.constant dense<0.000000e+00> : vector<8x8xf32>
    %45 = tpu.matmul %44, %31, %cst_33 {dimension_numbers = #tpu.dot_dimension_numbers<[1], [0], [0], [1], [0, 0, 1, 1], [], []>} : vector<8x8xbf16>, vector<8x8xbf16>, vector<8x8xf32> -> vector<8x8xf32>
    %c0_34 = arith.constant 0 : index
    %c2 = arith.constant 2 : index
    %c0_35 = arith.constant 0 : index
    %c0_36 = arith.constant 0 : index
    %46 = vector.load %arg2[%c0_34, %c2, %c0_35, %c0_36] : memref<1x4x8x8xbf16, #tpu.memory_space<vmem>>, vector<1x1x8x8xbf16>
    %47 = vector.shape_cast %46 : vector<1x1x8x8xbf16> to vector<8x8xbf16>
    %cst_37 = arith.constant 3.535160e-01 : bf16
    %48 = vector.broadcast %cst_37 : bf16 to vector<8x8xbf16>
    %49 = arith.mulf %47, %48 : vector<8x8xbf16>
    %c0_38 = arith.constant 0 : index
    %c2_39 = arith.constant 2 : index
    %c0_40 = arith.constant 0 : index
    %c0_41 = arith.constant 0 : index
    %50 = vector.load %arg3[%c0_38, %c2_39, %c0_40, %c0_41] : memref<1x4x8x8xbf16, #tpu.memory_space<vmem>>, vector<1x1x8x8xbf16>
    %51 = vector.shape_cast %50 : vector<1x1x8x8xbf16> to vector<8x8xbf16>
    %c0_42 = arith.constant 0 : index
    %c2_43 = arith.constant 2 : index
    %c0_44 = arith.constant 0 : index
    %c0_45 = arith.constant 0 : index
    %52 = vector.load %arg4[%c0_42, %c2_43, %c0_44, %c0_45] : memref<1x4x8x8xbf16, #tpu.memory_space<vmem>>, vector<1x1x8x8xbf16>
    %53 = vector.shape_cast %52 : vector<1x1x8x8xbf16> to vector<8x8xbf16>
    %cst_46 = arith.constant dense<0.000000e+00> : vector<8x8xf32>
    %54 = tpu.matmul %49, %51, %cst_46 {dimension_numbers = #tpu.dot_dimension_numbers<[1], [1], [0], [0], [0, 0, 1, 0], [], []>} : vector<8x8xbf16>, vector<8x8xbf16>, vector<8x8xf32> -> vector<8x8xf32>
    %55 = vector.broadcast %1 : vector<1x8xf32> to vector<8x8xf32>
    %56 = arith.addf %54, %55 : vector<8x8xf32>
    %cst_47 = arith.constant dense<0xFF800000> : vector<8xf32>
    %57 = vector.multi_reduction <maximumf>, %56, %cst_47 [1] : vector<8x8xf32> to vector<8xf32>
    %58 = vector.shape_cast %57 : vector<8xf32> to vector<8x1xf32>
    %59 = vector.broadcast %58 : vector<8x1xf32> to vector<8x8xf32>
    %60 = arith.subf %56, %59 : vector<8x8xf32>
    %61 = math.exp %60 : vector<8x8xf32>
    %cst_48 = arith.constant dense<0.000000e+00> : vector<8xf32>
    %62 = vector.multi_reduction <add>, %61, %cst_48 [1] : vector<8x8xf32> to vector<8xf32>
    %63 = vector.shape_cast %62 : vector<8xf32> to vector<8x1xf32>
    %64 = vector.broadcast %63 : vector<8x1xf32> to vector<8x8xf32>
    %65 = arith.divf %61, %64 : vector<8x8xf32>
    %66 = arith.truncf %65 : vector<8x8xf32> to vector<8x8xbf16>
    %cst_49 = arith.constant dense<0.000000e+00> : vector<8x8xf32>
    %67 = tpu.matmul %66, %53, %cst_49 {dimension_numbers = #tpu.dot_dimension_numbers<[1], [0], [0], [1], [0, 0, 1, 1], [], []>} : vector<8x8xbf16>, vector<8x8xbf16>, vector<8x8xf32> -> vector<8x8xf32>
    %c0_50 = arith.constant 0 : index
    %c3 = arith.constant 3 : index
    %c0_51 = arith.constant 0 : index
    %c0_52 = arith.constant 0 : index
    %68 = vector.load %arg2[%c0_50, %c3, %c0_51, %c0_52] : memref<1x4x8x8xbf16, #tpu.memory_space<vmem>>, vector<1x1x8x8xbf16>
    %69 = vector.shape_cast %68 : vector<1x1x8x8xbf16> to vector<8x8xbf16>
    %cst_53 = arith.constant 3.535160e-01 : bf16
    %70 = vector.broadcast %cst_53 : bf16 to vector<8x8xbf16>
    %71 = arith.mulf %69, %70 : vector<8x8xbf16>
    %c0_54 = arith.constant 0 : index
    %c3_55 = arith.constant 3 : index
    %c0_56 = arith.constant 0 : index
    %c0_57 = arith.constant 0 : index
    %72 = vector.load %arg3[%c0_54, %c3_55, %c0_56, %c0_57] : memref<1x4x8x8xbf16, #tpu.memory_space<vmem>>, vector<1x1x8x8xbf16>
    %73 = vector.shape_cast %72 : vector<1x1x8x8xbf16> to vector<8x8xbf16>
    %c0_58 = arith.constant 0 : index
    %c3_59 = arith.constant 3 : index
    %c0_60 = arith.constant 0 : index
    %c0_61 = arith.constant 0 : index
    %74 = vector.load %arg4[%c0_58, %c3_59, %c0_60, %c0_61] : memref<1x4x8x8xbf16, #tpu.memory_space<vmem>>, vector<1x1x8x8xbf16>
    %75 = vector.shape_cast %74 : vector<1x1x8x8xbf16> to vector<8x8xbf16>
    %cst_62 = arith.constant dense<0.000000e+00> : vector<8x8xf32>
    %76 = tpu.matmul %71, %73, %cst_62 {dimension_numbers = #tpu.dot_dimension_numbers<[1], [1], [0], [0], [0, 0, 1, 0], [], []>} : vector<8x8xbf16>, vector<8x8xbf16>, vector<8x8xf32> -> vector<8x8xf32>
    %77 = vector.broadcast %1 : vector<1x8xf32> to vector<8x8xf32>
    %78 = arith.addf %76, %77 : vector<8x8xf32>
    %cst_63 = arith.constant dense<0xFF800000> : vector<8xf32>
    %79 = vector.multi_reduction <maximumf>, %78, %cst_63 [1] : vector<8x8xf32> to vector<8xf32>
    %80 = vector.shape_cast %79 : vector<8xf32> to vector<8x1xf32>
    %81 = vector.broadcast %80 : vector<8x1xf32> to vector<8x8xf32>
    %82 = arith.subf %78, %81 : vector<8x8xf32>
    %83 = math.exp %82 : vector<8x8xf32>
    %cst_64 = arith.constant dense<0.000000e+00> : vector<8xf32>
    %84 = vector.multi_reduction <add>, %83, %cst_64 [1] : vector<8x8xf32> to vector<8xf32>
    %85 = vector.shape_cast %84 : vector<8xf32> to vector<8x1xf32>
    %86 = vector.broadcast %85 : vector<8x1xf32> to vector<8x8xf32>
    %87 = arith.divf %83, %86 : vector<8x8xf32>
    %88 = arith.truncf %87 : vector<8x8xf32> to vector<8x8xbf16>
    %cst_65 = arith.constant dense<0.000000e+00> : vector<8x8xf32>
    %89 = tpu.matmul %88, %75, %cst_65 {dimension_numbers = #tpu.dot_dimension_numbers<[1], [0], [0], [1], [0, 0, 1, 1], [], []>} : vector<8x8xbf16>, vector<8x8xbf16>, vector<8x8xf32> -> vector<8x8xf32>
    %90 = tpu.concatenate %23, %45, %67, %89 in 1 : vector<8x8xf32>, vector<8x8xf32>, vector<8x8xf32>, vector<8x8xf32> -> vector<8x32xf32>
    %91 = arith.truncf %90 : vector<8x32xf32> to vector<8x32xbf16>
    %c0_66 = arith.constant 0 : index
    %c0_67 = arith.constant 0 : index
    %c0_68 = arith.constant 0 : index
    %92 = vector.load %arg6[%c0_66, %c0_67, %c0_68] : memref<1x8x32xbf16, #tpu.memory_space<vmem>>, vector<1x8x32xbf16>
    %93 = vector.shape_cast %92 : vector<1x8x32xbf16> to vector<8x32xbf16>
    %94 = vector.shape_cast %91 : vector<8x32xbf16> to vector<1x8x32xbf16>
    tpu.vector_store %arg6[%c0_66, %c0_67, %c0_68], %94 {strides = array<i32>} : memref<1x8x32xbf16, #tpu.memory_space<vmem>>, vector<1x8x32xbf16>,
    return
  }
  func.func @transform_0(%arg0: i32, %arg1: i32) -> (i32, i32, i32, i32) {
    %c0_i32 = arith.constant 0 : i32
    %c0_i32_0 = arith.constant 0 : i32
    %c0_i32_1 = arith.constant 0 : i32
    return %arg0, %arg1, %c0_i32, %c0_i32_0 : i32, i32, i32, i32
  }
  func.func @transform_1(%arg0: i32, %arg1: i32) -> (i32, i32, i32, i32) {
    %c0_i32 = arith.constant 0 : i32
    %c0_i32_0 = arith.constant 0 : i32
    %c0_i32_1 = arith.constant 0 : i32
    return %arg0, %arg1, %c0_i32, %c0_i32_0 : i32, i32, i32, i32
  }
  func.func @transform_2(%arg0: i32, %arg1: i32) -> (i32, i32, i32, i32) {
    %c0_i32 = arith.constant 0 : i32
    %c0_i32_0 = arith.constant 0 : i32
    %c0_i32_1 = arith.constant 0 : i32
    return %arg0, %arg1, %c0_i32, %c0_i32_0 : i32, i32, i32, i32
  }
  func.func @transform_3(%arg0: i32, %arg1: i32) -> (i32, i32, i32) {
    %c0_i32 = arith.constant 0 : i32
    %c0_i32_0 = arith.constant 0 : i32
    %c0_i32_1 = arith.constant 0 : i32
    return %arg0, %c0_i32, %c0_i32_0 : i32, i32, i32
  }
  func.func @transform_4(%arg0: i32, %arg1: i32) -> (i32, i32, i32) {
    %c0_i32 = arith.constant 0 : i32
    %c0_i32_0 = arith.constant 0 : i32
    return %arg0, %c0_i32, %arg1 : i32, i32, i32
  }
}

module attributes {stable_mosaic.version = 11 : i64} {
  func.func @_matmul_res_ln_kernel(%arg0: i32, %arg1: i32, %arg2: memref<16x32xbf16, #tpu.memory_space<vmem>>, %arg3: memref<32x32xbf16, #tpu.memory_space<vmem>>, %arg4: memref<1x32xf32, #tpu.memory_space<vmem>>, %arg5: memref<16x32xbf16, #tpu.memory_space<vmem>>, %arg6: memref<1x32xf32, #tpu.memory_space<vmem>>, %arg7: memref<1x32xf32, #tpu.memory_space<vmem>>, %arg8: memref<16x32xbf16, #tpu.memory_space<vmem>>, %arg9: memref<16x32xf32, #tpu.memory_space<vmem>>) attributes {dimension_semantics = [#tpu.dimension_semantics<parallel>, #tpu.dimension_semantics<arbitrary>], iteration_bounds = array<i64: 1, 1>, scalar_prefetch = 0 : i64, scratch_operands = 1 : i64, tpu.core_type = #tpu.core_type<tc>, window_params = [{transform_indices = @transform_0, window_bounds = array<i64: 16, 32>}, {transform_indices = @transform_1, window_bounds = array<i64: 32, 32>}, {pipeline_mode = #tpu.pipeline_mode<synchronous>, transform_indices = @transform_2, window_bounds = array<i64: 1, 32>}, {transform_indices = @transform_3, window_bounds = array<i64: 16, 32>}, {pipeline_mode = #tpu.pipeline_mode<synchronous>, transform_indices = @transform_4, window_bounds = array<i64: 1, 32>}, {pipeline_mode = #tpu.pipeline_mode<synchronous>, transform_indices = @transform_5, window_bounds = array<i64: 1, 32>}, {transform_indices = @transform_6, window_bounds = array<i64: 16, 32>}]} {
    %c0_i32 = arith.constant 0 : i32
    %0 = arith.cmpi eq, %arg1, %c0_i32 : i32
    %1 = arith.extui %0 : i1 to i32
    %c0_i32_0 = arith.constant 0 : i32
    %2 = arith.cmpi ne, %1, %c0_i32_0 : i32
    scf.if %2 {
      %cst_10 = arith.constant 0.000000e+00 : f32
      %12 = vector.broadcast %cst_10 : f32 to vector<16x32xf32>
      %c0_11 = arith.constant 0 : index
      %c0_12 = arith.constant 0 : index
      %13 = vector.load %arg9[%c0_11, %c0_12] : memref<16x32xf32, #tpu.memory_space<vmem>>, vector<16x32xf32>
      tpu.vector_store %arg9[%c0_11, %c0_12], %12 {strides = array<i32>} : memref<16x32xf32, #tpu.memory_space<vmem>>, vector<16x32xf32>,
    } else {
    }
    %c0 = arith.constant 0 : index
    %c0_1 = arith.constant 0 : index
    %3 = vector.load %arg9[%c0, %c0_1] : memref<16x32xf32, #tpu.memory_space<vmem>>, vector<16x32xf32>
    %c0_2 = arith.constant 0 : index
    %c0_3 = arith.constant 0 : index
    %4 = vector.load %arg2[%c0_2, %c0_3] : memref<16x32xbf16, #tpu.memory_space<vmem>>, vector<16x32xbf16>
    %c0_4 = arith.constant 0 : index
    %c0_5 = arith.constant 0 : index
    %5 = vector.load %arg3[%c0_4, %c0_5] : memref<32x32xbf16, #tpu.memory_space<vmem>>, vector<32x32xbf16>
    %cst = arith.constant dense<0.000000e+00> : vector<16x32xf32>
    %6 = tpu.matmul %4, %5, %cst {dimension_numbers = #tpu.dot_dimension_numbers<[1], [0], [0], [1], [0, 0, 1, 1], [], []>} : vector<16x32xbf16>, vector<32x32xbf16>, vector<16x32xf32> -> vector<16x32xf32>
    %7 = arith.addf %3, %6 : vector<16x32xf32>
    %c0_6 = arith.constant 0 : index
    %c0_7 = arith.constant 0 : index
    %8 = vector.load %arg9[%c0_6, %c0_7] : memref<16x32xf32, #tpu.memory_space<vmem>>, vector<16x32xf32>
    tpu.vector_store %arg9[%c0_6, %c0_7], %7 {strides = array<i32>} : memref<16x32xf32, #tpu.memory_space<vmem>>, vector<16x32xf32>,
    %c0_i32_8 = arith.constant 0 : i32
    %9 = arith.cmpi eq, %arg1, %c0_i32_8 : i32
    %10 = arith.extui %9 : i1 to i32
    %c0_i32_9 = arith.constant 0 : i32
    %11 = arith.cmpi ne, %10, %c0_i32_9 : i32
    scf.if %11 {
      %c0_10 = arith.constant 0 : index
      %c0_11 = arith.constant 0 : index
      %12 = vector.load %arg9[%c0_10, %c0_11] : memref<16x32xf32, #tpu.memory_space<vmem>>, vector<16x32xf32>
      %c0_12 = arith.constant 0 : index
      %c0_13 = arith.constant 0 : index
      %13 = vector.load %arg4[%c0_12, %c0_13] : memref<1x32xf32, #tpu.memory_space<vmem>>, vector<1x32xf32>
      %14 = vector.broadcast %13 : vector<1x32xf32> to vector<16x32xf32>
      %15 = arith.addf %12, %14 : vector<16x32xf32>
      %c0_14 = arith.constant 0 : index
      %c0_15 = arith.constant 0 : index
      %16 = vector.load %arg5[%c0_14, %c0_15] : memref<16x32xbf16, #tpu.memory_space<vmem>>, vector<16x32xbf16>
      %17 = arith.extf %16 : vector<16x32xbf16> to vector<16x32xf32>
      %18 = arith.addf %15, %17 : vector<16x32xf32>
      %cst_16 = arith.constant dense<0.000000e+00> : vector<16xf32>
      %19 = vector.multi_reduction <add>, %18, %cst_16 [1] : vector<16x32xf32> to vector<16xf32>
      %20 = vector.shape_cast %19 : vector<16xf32> to vector<16x1xf32>
      %cst_17 = arith.constant 3.200000e+01 : f32
      %21 = vector.broadcast %cst_17 : f32 to vector<16x1xf32>
      %22 = arith.divf %20, %21 : vector<16x1xf32>
      %23 = vector.broadcast %22 : vector<16x1xf32> to vector<16x32xf32>
      %24 = arith.subf %18, %23 : vector<16x32xf32>
      %25 = arith.mulf %24, %24 : vector<16x32xf32>
      %cst_18 = arith.constant dense<0.000000e+00> : vector<16xf32>
      %26 = vector.multi_reduction <add>, %25, %cst_18 [1] : vector<16x32xf32> to vector<16xf32>
      %27 = vector.shape_cast %26 : vector<16xf32> to vector<16x1xf32>
      %cst_19 = arith.constant 3.200000e+01 : f32
      %28 = vector.broadcast %cst_19 : f32 to vector<16x1xf32>
      %29 = arith.divf %27, %28 : vector<16x1xf32>
      %30 = vector.broadcast %22 : vector<16x1xf32> to vector<16x32xf32>
      %31 = arith.subf %18, %30 : vector<16x32xf32>
      %cst_20 = arith.constant 9.99999974E-6 : f32
      %32 = vector.broadcast %cst_20 : f32 to vector<16x1xf32>
      %33 = arith.addf %29, %32 : vector<16x1xf32>
      %34 = math.rsqrt %33 : vector<16x1xf32>
      %35 = vector.broadcast %34 : vector<16x1xf32> to vector<16x32xf32>
      %36 = arith.mulf %31, %35 : vector<16x32xf32>
      %c0_21 = arith.constant 0 : index
      %c0_22 = arith.constant 0 : index
      %37 = vector.load %arg6[%c0_21, %c0_22] : memref<1x32xf32, #tpu.memory_space<vmem>>, vector<1x32xf32>
      %38 = vector.broadcast %37 : vector<1x32xf32> to vector<16x32xf32>
      %39 = arith.mulf %36, %38 : vector<16x32xf32>
      %c0_23 = arith.constant 0 : index
      %c0_24 = arith.constant 0 : index
      %40 = vector.load %arg7[%c0_23, %c0_24] : memref<1x32xf32, #tpu.memory_space<vmem>>, vector<1x32xf32>
      %41 = vector.broadcast %40 : vector<1x32xf32> to vector<16x32xf32>
      %42 = arith.addf %39, %41 : vector<16x32xf32>
      %43 = arith.truncf %42 : vector<16x32xf32> to vector<16x32xbf16>
      %c0_25 = arith.constant 0 : index
      %c0_26 = arith.constant 0 : index
      %44 = vector.load %arg8[%c0_25, %c0_26] : memref<16x32xbf16, #tpu.memory_space<vmem>>, vector<16x32xbf16>
      tpu.vector_store %arg8[%c0_25, %c0_26], %43 {strides = array<i32>} : memref<16x32xbf16, #tpu.memory_space<vmem>>, vector<16x32xbf16>,
    } else {
    }
    return
  }
  func.func @transform_0(%arg0: i32, %arg1: i32) -> (i32, i32) {
    %c0_i32 = arith.constant 0 : i32
    return %arg0, %arg1 : i32, i32
  }
  func.func @transform_1(%arg0: i32, %arg1: i32) -> (i32, i32) {
    %c0_i32 = arith.constant 0 : i32
    %c0_i32_0 = arith.constant 0 : i32
    return %arg1, %c0_i32 : i32, i32
  }
  func.func @transform_2(%arg0: i32, %arg1: i32) -> (i32, i32) {
    %c0_i32 = arith.constant 0 : i32
    %c0_i32_0 = arith.constant 0 : i32
    %c0_i32_1 = arith.constant 0 : i32
    return %c0_i32, %c0_i32_0 : i32, i32
  }
  func.func @transform_3(%arg0: i32, %arg1: i32) -> (i32, i32) {
    %c0_i32 = arith.constant 0 : i32
    %c0_i32_0 = arith.constant 0 : i32
    return %arg0, %c0_i32 : i32, i32
  }
  func.func @transform_4(%arg0: i32, %arg1: i32) -> (i32, i32) {
    %c0_i32 = arith.constant 0 : i32
    %c0_i32_0 = arith.constant 0 : i32
    %c0_i32_1 = arith.constant 0 : i32
    return %c0_i32, %c0_i32_0 : i32, i32
  }
  func.func @transform_5(%arg0: i32, %arg1: i32) -> (i32, i32) {
    %c0_i32 = arith.constant 0 : i32
    %c0_i32_0 = arith.constant 0 : i32
    %c0_i32_1 = arith.constant 0 : i32
    return %c0_i32, %c0_i32_0 : i32, i32
  }
  func.func @transform_6(%arg0: i32, %arg1: i32) -> (i32, i32) {
    %c0_i32 = arith.constant 0 : i32
    %c0_i32_0 = arith.constant 0 : i32
    return %arg0, %c0_i32 : i32, i32
  }
}

module attributes {stable_mosaic.version = 11 : i64} {
  func.func @_matmul_bias_kernel(%arg0: i32, %arg1: i32, %arg2: i32, %arg3: memref<16x32xbf16, #tpu.memory_space<vmem>>, %arg4: memref<32x64xbf16, #tpu.memory_space<vmem>>, %arg5: memref<1x64xf32, #tpu.memory_space<vmem>>, %arg6: memref<16x64xbf16, #tpu.memory_space<vmem>>, %arg7: memref<16x64xf32, #tpu.memory_space<vmem>>) attributes {dimension_semantics = [#tpu.dimension_semantics<parallel>, #tpu.dimension_semantics<parallel>, #tpu.dimension_semantics<arbitrary>], iteration_bounds = array<i64: 1, 1, 1>, scalar_prefetch = 0 : i64, scratch_operands = 1 : i64, tpu.core_type = #tpu.core_type<tc>, window_params = [{transform_indices = @transform_0, window_bounds = array<i64: 16, 32>}, {transform_indices = @transform_1, window_bounds = array<i64: 32, 64>}, {transform_indices = @transform_2, window_bounds = array<i64: 1, 64>}, {transform_indices = @transform_3, window_bounds = array<i64: 16, 64>}]} {
    %c0_i32 = arith.constant 0 : i32
    %0 = arith.cmpi eq, %arg2, %c0_i32 : i32
    %1 = arith.extui %0 : i1 to i32
    %c0_i32_0 = arith.constant 0 : i32
    %2 = arith.cmpi ne, %1, %c0_i32_0 : i32
    scf.if %2 {
      %cst_10 = arith.constant 0.000000e+00 : f32
      %12 = vector.broadcast %cst_10 : f32 to vector<16x64xf32>
      %c0_11 = arith.constant 0 : index
      %c0_12 = arith.constant 0 : index
      %13 = vector.load %arg7[%c0_11, %c0_12] : memref<16x64xf32, #tpu.memory_space<vmem>>, vector<16x64xf32>
      tpu.vector_store %arg7[%c0_11, %c0_12], %12 {strides = array<i32>} : memref<16x64xf32, #tpu.memory_space<vmem>>, vector<16x64xf32>,
    } else {
    }
    %c0 = arith.constant 0 : index
    %c0_1 = arith.constant 0 : index
    %3 = vector.load %arg7[%c0, %c0_1] : memref<16x64xf32, #tpu.memory_space<vmem>>, vector<16x64xf32>
    %c0_2 = arith.constant 0 : index
    %c0_3 = arith.constant 0 : index
    %4 = vector.load %arg3[%c0_2, %c0_3] : memref<16x32xbf16, #tpu.memory_space<vmem>>, vector<16x32xbf16>
    %c0_4 = arith.constant 0 : index
    %c0_5 = arith.constant 0 : index
    %5 = vector.load %arg4[%c0_4, %c0_5] : memref<32x64xbf16, #tpu.memory_space<vmem>>, vector<32x64xbf16>
    %cst = arith.constant dense<0.000000e+00> : vector<16x64xf32>
    %6 = tpu.matmul %4, %5, %cst {dimension_numbers = #tpu.dot_dimension_numbers<[1], [0], [0], [1], [0, 0, 1, 1], [], []>} : vector<16x32xbf16>, vector<32x64xbf16>, vector<16x64xf32> -> vector<16x64xf32>
    %7 = arith.addf %3, %6 : vector<16x64xf32>
    %c0_6 = arith.constant 0 : index
    %c0_7 = arith.constant 0 : index
    %8 = vector.load %arg7[%c0_6, %c0_7] : memref<16x64xf32, #tpu.memory_space<vmem>>, vector<16x64xf32>
    tpu.vector_store %arg7[%c0_6, %c0_7], %7 {strides = array<i32>} : memref<16x64xf32, #tpu.memory_space<vmem>>, vector<16x64xf32>,
    %c0_i32_8 = arith.constant 0 : i32
    %9 = arith.cmpi eq, %arg2, %c0_i32_8 : i32
    %10 = arith.extui %9 : i1 to i32
    %c0_i32_9 = arith.constant 0 : i32
    %11 = arith.cmpi ne, %10, %c0_i32_9 : i32
    scf.if %11 {
      %c0_10 = arith.constant 0 : index
      %c0_11 = arith.constant 0 : index
      %12 = vector.load %arg7[%c0_10, %c0_11] : memref<16x64xf32, #tpu.memory_space<vmem>>, vector<16x64xf32>
      %c0_12 = arith.constant 0 : index
      %c0_13 = arith.constant 0 : index
      %13 = vector.load %arg5[%c0_12, %c0_13] : memref<1x64xf32, #tpu.memory_space<vmem>>, vector<1x64xf32>
      %14 = vector.broadcast %13 : vector<1x64xf32> to vector<16x64xf32>
      %15 = arith.addf %12, %14 : vector<16x64xf32>
      %16 = arith.mulf %15, %15 : vector<16x64xf32>
      %17 = arith.mulf %15, %16 : vector<16x64xf32>
      %cst_14 = arith.constant 4.471500e-02 : f32
      %18 = vector.broadcast %cst_14 : f32 to vector<16x64xf32>
      %19 = arith.mulf %18, %17 : vector<16x64xf32>
      %20 = arith.addf %15, %19 : vector<16x64xf32>
      %cst_15 = arith.constant 0.797884583 : f32
      %21 = vector.broadcast %cst_15 : f32 to vector<16x64xf32>
      %22 = arith.mulf %21, %20 : vector<16x64xf32>
      %23 = math.tanh %22 : vector<16x64xf32>
      %cst_16 = arith.constant 1.000000e+00 : f32
      %24 = vector.broadcast %cst_16 : f32 to vector<16x64xf32>
      %25 = arith.addf %24, %23 : vector<16x64xf32>
      %cst_17 = arith.constant 5.000000e-01 : f32
      %26 = vector.broadcast %cst_17 : f32 to vector<16x64xf32>
      %27 = arith.mulf %26, %25 : vector<16x64xf32>
      %28 = arith.mulf %15, %27 : vector<16x64xf32>
      %29 = arith.truncf %28 : vector<16x64xf32> to vector<16x64xbf16>
      %c0_18 = arith.constant 0 : index
      %c0_19 = arith.constant 0 : index
      %30 = vector.load %arg6[%c0_18, %c0_19] : memref<16x64xbf16, #tpu.memory_space<vmem>>, vector<16x64xbf16>
      tpu.vector_store %arg6[%c0_18, %c0_19], %29 {strides = array<i32>} : memref<16x64xbf16, #tpu.memory_space<vmem>>, vector<16x64xbf16>,
    } else {
    }
    return
  }
  func.func @transform_0(%arg0: i32, %arg1: i32, %arg2: i32) -> (i32, i32) {
    %c0_i32 = arith.constant 0 : i32
    return %arg0, %arg2 : i32, i32
  }
  func.func @transform_1(%arg0: i32, %arg1: i32, %arg2: i32) -> (i32, i32) {
    %c0_i32 = arith.constant 0 : i32
    return %arg2, %arg1 : i32, i32
  }
  func.func @transform_2(%arg0: i32, %arg1: i32, %arg2: i32) -> (i32, i32) {
    %c0_i32 = arith.constant 0 : i32
    %c0_i32_0 = arith.constant 0 : i32
    return %c0_i32, %arg1 : i32, i32
  }
  func.func @transform_3(%arg0: i32, %arg1: i32, %arg2: i32) -> (i32, i32) {
    %c0_i32 = arith.constant 0 : i32
    return %arg0, %arg1 : i32, i32
  }
}

module attributes {stable_mosaic.version = 11 : i64} {
  func.func @_matmul_res_ln_kernel(%arg0: i32, %arg1: i32, %arg2: memref<16x64xbf16, #tpu.memory_space<vmem>>, %arg3: memref<64x32xbf16, #tpu.memory_space<vmem>>, %arg4: memref<1x32xf32, #tpu.memory_space<vmem>>, %arg5: memref<16x32xbf16, #tpu.memory_space<vmem>>, %arg6: memref<1x32xf32, #tpu.memory_space<vmem>>, %arg7: memref<1x32xf32, #tpu.memory_space<vmem>>, %arg8: memref<16x32xbf16, #tpu.memory_space<vmem>>, %arg9: memref<16x32xf32, #tpu.memory_space<vmem>>) attributes {dimension_semantics = [#tpu.dimension_semantics<parallel>, #tpu.dimension_semantics<arbitrary>], iteration_bounds = array<i64: 1, 1>, scalar_prefetch = 0 : i64, scratch_operands = 1 : i64, tpu.core_type = #tpu.core_type<tc>, window_params = [{transform_indices = @transform_0, window_bounds = array<i64: 16, 64>}, {transform_indices = @transform_1, window_bounds = array<i64: 64, 32>}, {pipeline_mode = #tpu.pipeline_mode<synchronous>, transform_indices = @transform_2, window_bounds = array<i64: 1, 32>}, {transform_indices = @transform_3, window_bounds = array<i64: 16, 32>}, {pipeline_mode = #tpu.pipeline_mode<synchronous>, transform_indices = @transform_4, window_bounds = array<i64: 1, 32>}, {pipeline_mode = #tpu.pipeline_mode<synchronous>, transform_indices = @transform_5, window_bounds = array<i64: 1, 32>}, {transform_indices = @transform_6, window_bounds = array<i64: 16, 32>}]} {
    %c0_i32 = arith.constant 0 : i32
    %0 = arith.cmpi eq, %arg1, %c0_i32 : i32
    %1 = arith.extui %0 : i1 to i32
    %c0_i32_0 = arith.constant 0 : i32
    %2 = arith.cmpi ne, %1, %c0_i32_0 : i32
    scf.if %2 {
      %cst_10 = arith.constant 0.000000e+00 : f32
      %12 = vector.broadcast %cst_10 : f32 to vector<16x32xf32>
      %c0_11 = arith.constant 0 : index
      %c0_12 = arith.constant 0 : index
      %13 = vector.load %arg9[%c0_11, %c0_12] : memref<16x32xf32, #tpu.memory_space<vmem>>, vector<16x32xf32>
      tpu.vector_store %arg9[%c0_11, %c0_12], %12 {strides = array<i32>} : memref<16x32xf32, #tpu.memory_space<vmem>>, vector<16x32xf32>,
    } else {
    }
    %c0 = arith.constant 0 : index
    %c0_1 = arith.constant 0 : index
    %3 = vector.load %arg9[%c0, %c0_1] : memref<16x32xf32, #tpu.memory_space<vmem>>, vector<16x32xf32>
    %c0_2 = arith.constant 0 : index
    %c0_3 = arith.constant 0 : index
    %4 = vector.load %arg2[%c0_2, %c0_3] : memref<16x64xbf16, #tpu.memory_space<vmem>>, vector<16x64xbf16>
    %c0_4 = arith.constant 0 : index
    %c0_5 = arith.constant 0 : index
    %5 = vector.load %arg3[%c0_4, %c0_5] : memref<64x32xbf16, #tpu.memory_space<vmem>>, vector<64x32xbf16>
    %cst = arith.constant dense<0.000000e+00> : vector<16x32xf32>
    %6 = tpu.matmul %4, %5, %cst {dimension_numbers = #tpu.dot_dimension_numbers<[1], [0], [0], [1], [0, 0, 1, 1], [], []>} : vector<16x64xbf16>, vector<64x32xbf16>, vector<16x32xf32> -> vector<16x32xf32>
    %7 = arith.addf %3, %6 : vector<16x32xf32>
    %c0_6 = arith.constant 0 : index
    %c0_7 = arith.constant 0 : index
    %8 = vector.load %arg9[%c0_6, %c0_7] : memref<16x32xf32, #tpu.memory_space<vmem>>, vector<16x32xf32>
    tpu.vector_store %arg9[%c0_6, %c0_7], %7 {strides = array<i32>} : memref<16x32xf32, #tpu.memory_space<vmem>>, vector<16x32xf32>,
    %c0_i32_8 = arith.constant 0 : i32
    %9 = arith.cmpi eq, %arg1, %c0_i32_8 : i32
    %10 = arith.extui %9 : i1 to i32
    %c0_i32_9 = arith.constant 0 : i32
    %11 = arith.cmpi ne, %10, %c0_i32_9 : i32
    scf.if %11 {
      %c0_10 = arith.constant 0 : index
      %c0_11 = arith.constant 0 : index
      %12 = vector.load %arg9[%c0_10, %c0_11] : memref<16x32xf32, #tpu.memory_space<vmem>>, vector<16x32xf32>
      %c0_12 = arith.constant 0 : index
      %c0_13 = arith.constant 0 : index
      %13 = vector.load %arg4[%c0_12, %c0_13] : memref<1x32xf32, #tpu.memory_space<vmem>>, vector<1x32xf32>
      %14 = vector.broadcast %13 : vector<1x32xf32> to vector<16x32xf32>
      %15 = arith.addf %12, %14 : vector<16x32xf32>
      %c0_14 = arith.constant 0 : index
      %c0_15 = arith.constant 0 : index
      %16 = vector.load %arg5[%c0_14, %c0_15] : memref<16x32xbf16, #tpu.memory_space<vmem>>, vector<16x32xbf16>
      %17 = arith.extf %16 : vector<16x32xbf16> to vector<16x32xf32>
      %18 = arith.addf %15, %17 : vector<16x32xf32>
      %cst_16 = arith.constant dense<0.000000e+00> : vector<16xf32>
      %19 = vector.multi_reduction <add>, %18, %cst_16 [1] : vector<16x32xf32> to vector<16xf32>
      %20 = vector.shape_cast %19 : vector<16xf32> to vector<16x1xf32>
      %cst_17 = arith.constant 3.200000e+01 : f32
      %21 = vector.broadcast %cst_17 : f32 to vector<16x1xf32>
      %22 = arith.divf %20, %21 : vector<16x1xf32>
      %23 = vector.broadcast %22 : vector<16x1xf32> to vector<16x32xf32>
      %24 = arith.subf %18, %23 : vector<16x32xf32>
      %25 = arith.mulf %24, %24 : vector<16x32xf32>
      %cst_18 = arith.constant dense<0.000000e+00> : vector<16xf32>
      %26 = vector.multi_reduction <add>, %25, %cst_18 [1] : vector<16x32xf32> to vector<16xf32>
      %27 = vector.shape_cast %26 : vector<16xf32> to vector<16x1xf32>
      %cst_19 = arith.constant 3.200000e+01 : f32
      %28 = vector.broadcast %cst_19 : f32 to vector<16x1xf32>
      %29 = arith.divf %27, %28 : vector<16x1xf32>
      %30 = vector.broadcast %22 : vector<16x1xf32> to vector<16x32xf32>
      %31 = arith.subf %18, %30 : vector<16x32xf32>
      %cst_20 = arith.constant 9.99999974E-6 : f32
      %32 = vector.broadcast %cst_20 : f32 to vector<16x1xf32>
      %33 = arith.addf %29, %32 : vector<16x1xf32>
      %34 = math.rsqrt %33 : vector<16x1xf32>
      %35 = vector.broadcast %34 : vector<16x1xf32> to vector<16x32xf32>
      %36 = arith.mulf %31, %35 : vector<16x32xf32>
      %c0_21 = arith.constant 0 : index
      %c0_22 = arith.constant 0 : index
      %37 = vector.load %arg6[%c0_21, %c0_22] : memref<1x32xf32, #tpu.memory_space<vmem>>, vector<1x32xf32>
      %38 = vector.broadcast %37 : vector<1x32xf32> to vector<16x32xf32>
      %39 = arith.mulf %36, %38 : vector<16x32xf32>
      %c0_23 = arith.constant 0 : index
      %c0_24 = arith.constant 0 : index
      %40 = vector.load %arg7[%c0_23, %c0_24] : memref<1x32xf32, #tpu.memory_space<vmem>>, vector<1x32xf32>
      %41 = vector.broadcast %40 : vector<1x32xf32> to vector<16x32xf32>
      %42 = arith.addf %39, %41 : vector<16x32xf32>
      %43 = arith.truncf %42 : vector<16x32xf32> to vector<16x32xbf16>
      %c0_25 = arith.constant 0 : index
      %c0_26 = arith.constant 0 : index
      %44 = vector.load %arg8[%c0_25, %c0_26] : memref<16x32xbf16, #tpu.memory_space<vmem>>, vector<16x32xbf16>
      tpu.vector_store %arg8[%c0_25, %c0_26], %43 {strides = array<i32>} : memref<16x32xbf16, #tpu.memory_space<vmem>>, vector<16x32xbf16>,
    } else {
    }
    return
  }
  func.func @transform_0(%arg0: i32, %arg1: i32) -> (i32, i32) {
    %c0_i32 = arith.constant 0 : i32
    return %arg0, %arg1 : i32, i32
  }
  func.func @transform_1(%arg0: i32, %arg1: i32) -> (i32, i32) {
    %c0_i32 = arith.constant 0 : i32
    %c0_i32_0 = arith.constant 0 : i32
    return %arg1, %c0_i32 : i32, i32
  }
  func.func @transform_2(%arg0: i32, %arg1: i32) -> (i32, i32) {
    %c0_i32 = arith.constant 0 : i32
    %c0_i32_0 = arith.constant 0 : i32
    %c0_i32_1 = arith.constant 0 : i32
    return %c0_i32, %c0_i32_0 : i32, i32
  }
  func.func @transform_3(%arg0: i32, %arg1: i32) -> (i32, i32) {
    %c0_i32 = arith.constant 0 : i32
    %c0_i32_0 = arith.constant 0 : i32
    return %arg0, %c0_i32 : i32, i32
  }
  func.func @transform_4(%arg0: i32, %arg1: i32) -> (i32, i32) {
    %c0_i32 = arith.constant 0 : i32
    %c0_i32_0 = arith.constant 0 : i32
    %c0_i32_1 = arith.constant 0 : i32
    return %c0_i32, %c0_i32_0 : i32, i32
  }
  func.func @transform_5(%arg0: i32, %arg1: i32) -> (i32, i32) {
    %c0_i32 = arith.constant 0 : i32
    %c0_i32_0 = arith.constant 0 : i32
    %c0_i32_1 = arith.constant 0 : i32
    return %c0_i32, %c0_i32_0 : i32, i32
  }
  func.func @transform_6(%arg0: i32, %arg1: i32) -> (i32, i32) {
    %c0_i32 = arith.constant 0 : i32
    %c0_i32_0 = arith.constant 0 : i32
    return %arg0, %c0_i32 : i32, i32
  }
}

</mosaic_0001>

<llo_original>
// kernel: model_forward.21
$region0: #{model_forward.21}
  #allocation0 [shape = 'u32[]', space=smem, size = 0x4, offset = 0x4, fixed_abs, tag = 'smem constant byte address 0x4 - core index']
  #allocation1 [shape = 'u32[72,128]{1,0:T(1,128)}', space=vmem, size = 0x9000, scoped, tag = 'internal scratch']
  %s0 = inlined_call_operand.vmem [shape: bf16[2,8,32], index: 0, kind: input, shape index: {}]
  %s1 = inlined_call_operand.vmem [shape: f32[8,32], index: 1, kind: input, shape index: {}]
  %s2 = inlined_call_operand.vmem [shape: f32[1,32], index: 2, kind: input, shape index: {}]
  %s3 = inlined_call_operand.vmem [shape: f32[1,32], index: 3, kind: input, shape index: {}]
  %s4 = inlined_call_operand.vmem [shape: bf16[2,8,32], index: 4, kind: output, shape index: {}]
  %s5 = sld [smem:[#allocation0]]
  $region49: #{model_forward.21} parent=0
    _
  %s7 = ssub.s32 1, %s5
  %s8 = scalar_select 0, %s7, %s5
  loop: start=0, step=1, limit=4
  $region2: #{model_forward.21} parent=0 // loop_pre_header
    _
  $region3: #{model_forward.21} parent=0 // loop_header
    %s10 = sphi 0, %s14
    %p11 = scmp.ge.s32.totalorder %s10, 4
    %s17 = sphi 0, %s29
    %s18 = sphi 0, %s25
    %s19 = sphi 0, %s17
    %s20 = sphi 0, %s18
    %s21 = sphi 0, %s19
    %s22 = sphi 0, %s20
    %s34 = sphi 0, %s36
    %s37 = sphi 0, %s34
    %s38 = sphi 0, %s37
    %s54 = sphi 0, %s38
    %s60 = sphi 0, %s62
    %s63 = sphi 0, %s60
    %s64 = sphi 0, %s63
    %s80 = sphi 0, %s64
    %s84 = sphi 0, %s84
    %s86 = sphi 0, %s84
    %s87 = sphi 0, %s86
    %s101 = sphi 0, %s87
    %s105 = sphi 0, %s105
    %s107 = sphi 0, %s105
    %s108 = sphi 0, %s107
    %s122 = sphi 0, %s108
    %s130 = sphi 0, %s132
    %s133 = sphi 0, %s130
    %s134 = sphi 0, %s133
    %s150 = sphi 0, %s134
  $region4: #{model_forward.21} parent=0 // loop_header_branch
    %13 = sbr.rel (%p11) target = $region8
  $region5: #{model_forward.21} parent=0 // loop_body
    %s15 = ssub.s32 %s10, 1
    %s16 = ssub.s32 %s10, 2
    %s23 = sadd.s32 1, %s18
    %p24 = scmp.ge.s32.totalorder %s23, 1
    %s25 = scalar_select %p24, 0, %s23
    %s26 = sadd.s32 1, %s17
    %s27 = scalar_select %p24, %s26, %s17
    %p28 = scmp.ge.s32.totalorder %s27, 2
    %s29 = scalar_select %p28, 0, %s27
    %s30 = ssub.s32 %s17, %s29
    %s31 = ssub.s32 %s18, %s25
    %s32 = sor.u32 %s30, %s31
    %p33 = scmp.eq.s32.totalorder %s32, 0
    %s35 = sadd.s32 %s34, 1
    %s36 = scalar_select %p33, %s34, %s35
    %p39 = pneg %p33
    %p40 = scmp.eq.s32.totalorder %s10, 1
    %p41 = por %p39, %p40
    %p42 = scmp.ne.s32.totalorder %s34, %s37
    %p43 = scmp.eq.s32.totalorder %s10, 0
    %p44 = por %p42, %p43
    %p45 = scmp.ne.s32.totalorder %s34, %s37
    %p46 = scmp.eq.s32.totalorder %s15, 1
    %p47 = por %p45, %p46
    %p48 = scmp.ne.s32.totalorder %s37, %s38
    %p49 = scmp.eq.s32.totalorder %s15, 0
    %p50 = por %p48, %p49
    %p51 = scmp.ne.s32.totalorder %s37, %s38
    %p52 = scmp.eq.s32.totalorder %s16, 1
    %p53 = por %p51, %p52
    %p55 = scmp.ne.s32.totalorder %s38, %s54
    %p56 = scmp.eq.s32.totalorder %s16, 0
    %p57 = por %p55, %p56
    %s58 = ssub.s32 %s18, %s25
    %p59 = scmp.eq.s32.totalorder %s58, 0
    %s61 = sadd.s32 %s60, 1
    %s62 = scalar_select %p59, %s60, %s61
    %p65 = pneg %p59
    %p66 = scmp.eq.s32.totalorder %s10, 1
    %p67 = por %p65, %p66
    %p68 = scmp.ne.s32.totalorder %s60, %s63
    %p69 = scmp.eq.s32.totalorder %s10, 0
    %p70 = por %p68, %p69
    %p71 = scmp.ne.s32.totalorder %s60, %s63
    %p72 = scmp.eq.s32.totalorder %s15, 1
    %p73 = por %p71, %p72
    %p74 = scmp.ne.s32.totalorder %s63, %s64
    %p75 = scmp.eq.s32.totalorder %s15, 0
    %p76 = por %p74, %p75
    %p77 = scmp.ne.s32.totalorder %s63, %s64
    %p78 = scmp.eq.s32.totalorder %s16, 1
    %p79 = por %p77, %p78
    %p81 = scmp.ne.s32.totalorder %s64, %s80
    %p82 = scmp.eq.s32.totalorder %s16, 0
    %p83 = por %p81, %p82
    %s85 = sadd.s32 %s84, 1
    %p88 = scmp.eq.s32.totalorder %s10, 1
    %p89 = scmp.ne.s32.totalorder %s84, %s86
    %p90 = scmp.eq.s32.totalorder %s10, 0
    %p91 = por %p89, %p90
    %p92 = scmp.ne.s32.totalorder %s84, %s86
    %p93 = scmp.eq.s32.totalorder %s15, 1
    %p94 = por %p92, %p93
    %p95 = scmp.ne.s32.totalorder %s86, %s87
    %p96 = scmp.eq.s32.totalorder %s15, 0
    %p97 = por %p95, %p96
    %p98 = scmp.ne.s32.totalorder %s86, %s87
    %p99 = scmp.eq.s32.totalorder %s16, 1
    %p100 = por %p98, %p99
    %p102 = scmp.ne.s32.totalorder %s87, %s101
    %p103 = scmp.eq.s32.totalorder %s16, 0
    %p104 = por %p102, %p103
    %s106 = sadd.s32 %s105, 1
    %p109 = scmp.eq.s32.totalorder %s10, 1
    %p110 = scmp.ne.s32.totalorder %s105, %s107
    %p111 = scmp.eq.s32.totalorder %s10, 0
    %p112 = por %p110, %p111
    %p113 = scmp.ne.s32.totalorder %s105, %s107
    %p114 = scmp.eq.s32.totalorder %s15, 1
    %p115 = por %p113, %p114
    %p116 = scmp.ne.s32.totalorder %s107, %s108
    %p117 = scmp.eq.s32.totalorder %s15, 0
    %p118 = por %p116, %p117
    %p119 = scmp.ne.s32.totalorder %s107, %s108
    %p120 = scmp.eq.s32.totalorder %s16, 1
    %p121 = por %p119, %p120
    %p123 = scmp.ne.s32.totalorder %s108, %s122
    %p124 = scmp.eq.s32.totalorder %s16, 0
    %p125 = por %p123, %p124
    %s126 = ssub.s32 %s17, %s29
    %s127 = ssub.s32 %s18, %s25
    %s128 = sor.u32 %s126, %s127
    %p129 = scmp.eq.s32.totalorder %s128, 0
    %s131 = sadd.s32 %s130, 1
    %s132 = scalar_select %p129, %s130, %s131
    %p135 = pneg %p129
    %p136 = scmp.eq.s32.totalorder %s10, 1
    %p137 = por %p135, %p136
    %p138 = scmp.ne.s32.totalorder %s130, %s133
    %p139 = scmp.eq.s32.totalorder %s10, 0
    %p140 = por %p138, %p139
    %p141 = scmp.ne.s32.totalorder %s130, %s133
    %p142 = scmp.eq.s32.totalorder %s15, 1
    %p143 = por %p141, %p142
    %p144 = scmp.ne.s32.totalorder %s133, %s134
    %p145 = scmp.eq.s32.totalorder %s15, 0
    %p146 = por %p144, %p145
    %p147 = scmp.ne.s32.totalorder %s133, %s134
    %p148 = scmp.eq.s32.totalorder %s16, 1
    %p149 = por %p147, %p148
    %p151 = scmp.ne.s32.totalorder %s134, %s150
    %p152 = scmp.eq.s32.totalorder %s16, 0
    %p153 = por %p151, %p152
    %p154 = scmp.le.s32.totalorder 1, %s10
    %p155 = scmp.lt.s32.totalorder %s10, 3
    %p156 = pnand %p154, %p155
    %p157 = pneg %p156
    // Predicated region
    $region9: #{model_forward.21} parent=5 // pred_check
      _
    $region10: #{model_forward.21} parent=5 // pred_check_branch
      %159 = sbr.rel (%p156) target = $region12
    $region11: #{model_forward.21} parent=5 // pred_region
      %s160 = ssub.s32 %s10, 1
      // Predicated region
      $region13: #{model_forward.21} parent=11 // pred_check
        %p161 = pneg %p76
      $region14: #{model_forward.21} parent=11 // pred_check_branch
        %163 = sbr.rel (%p161) target = $region16
      $region15: #{model_forward.21} parent=11 // pred_region
        %p164 = scmp.lt.s32.totalorder %s20, 0
        %s165 = scalar_select %p164, %s20, 0
        %s166 = smul.addr %s165, 8
        %s167 = scalar_lea.vmem %s1, %s166
      $region16: #{model_forward.21} parent=11 // pred_fallthru
        _
      // Predicated region
      $region17: #{model_forward.21} parent=11 // pred_check
        %p168 = pneg %p97
      $region18: #{model_forward.21} parent=11 // pred_check_branch
        %170 = sbr.rel (%p168) target = $region20
      $region19: #{model_forward.21} parent=11 // pred_region
        _
      $region20: #{model_forward.21} parent=11 // pred_fallthru
        _
      // Predicated region
      $region21: #{model_forward.21} parent=11 // pred_check
        %p171 = pneg %p118
      $region22: #{model_forward.21} parent=11 // pred_check_branch
        %173 = sbr.rel (%p171) target = $region24
      $region23: #{model_forward.21} parent=11 // pred_region
        _
      $region24: #{model_forward.21} parent=11 // pred_fallthru
        _
    $region12: #{model_forward.21} parent=5 // pred_fallthru
      _
    %p174 = scmp.lt.s32.totalorder %s10, 2
    // Predicated region
    $region25: #{model_forward.21} parent=5 // pred_check
      %p175 = pneg %p174
    $region26: #{model_forward.21} parent=5 // pred_check_branch
      %177 = sbr.rel (%p175) target = $region28
    $region27: #{model_forward.21} parent=5 // pred_region
      // Predicated region
      $region29: #{model_forward.21} parent=27 // pred_check
        %p178 = pneg %p44
      $region30: #{model_forward.21} parent=27 // pred_check_branch
        %180 = sbr.rel (%p178) target = $region32
      $region31: #{model_forward.21} parent=27 // pred_region
        %p181 = scmp.lt.s32.totalorder %s17, 1
        %s182 = scalar_select %p181, %s17, 1
        %p183 = scmp.lt.s32.totalorder %s18, 0
        %s184 = scalar_select %p183, %s18, 0
        %s185 = sadd.s32 %s184, %s182
        %s186 = smul.addr %s185, 4
        %s187 = scalar_lea.vmem %s0, %s186
      $region32: #{model_forward.21} parent=27 // pred_fallthru
        _
    $region28: #{model_forward.21} parent=5 // pred_fallthru
      _
    %p188 = scmp.le.s32.totalorder 1, %s10
    %p189 = scmp.lt.s32.totalorder %s10, 3
    %p190 = pnand %p188, %p189
    %p191 = pneg %p190
    // Predicated region
    $region33: #{model_forward.21} parent=5 // pred_check
      _
    $region34: #{model_forward.21} parent=5 // pred_check_branch
      %193 = sbr.rel (%p190) target = $region36
    $region35: #{model_forward.21} parent=5 // pred_region
      %s194 = ssub.s32 %s10, 1
      %p195 = scmp.lt.s32.totalorder %s19, 1
      %s196 = scalar_select %p195, %s19, 1
      %p197 = scmp.lt.s32.totalorder %s20, 0
      %s198 = scalar_select %p197, %s20, 0
      %s199 = sadd.s32 %s198, %s196
      %s200 = smul.addr %s199, 4
      %s201 = scalar_lea.vmem %s0, %s200
      %p202 = pneg %p50
      %p203 = pneg %p47
      %p204 = scmp.lt.s32.totalorder %s20, 0
      %s205 = scalar_select %p204, %s20, 0
      %s206 = smul.addr %s205, 8
      %s207 = scalar_lea.vmem %s1, %s206
      %p208 = pneg %p76
      %p209 = pneg %p73
      %p210 = pneg %p97
      %p211 = pneg %p94
      %p212 = pneg %p118
      %p213 = pneg %p115
      %p214 = pneg %p146
      %p215 = pneg %p143
      %p216 = scmp.lt.s32.totalorder %s19, 1
      %s217 = scalar_select %p216, %s19, 1
      %p218 = scmp.lt.s32.totalorder %s20, 0
      %s219 = scalar_select %p218, %s20, 0
      %s220 = sadd.s32 %s219, %s217
      %s221 = smul.addr %s220, 4
      %s222 = scalar_lea.vmem %s4, %s221
      %p223 = scmp.lt.s32.totalorder %s19, 1
      %s224 = scalar_select %p223, %s19, 1
      %p225 = scmp.lt.s32.totalorder %s20, 0
      %s226 = scalar_select %p225, %s20, 0
      %s227 = sadd.s32 %s226, %s224
      %s228 = smul.addr %s227, 4
      %s229 = scalar_lea.vmem %s0, %s228
      %p230 = scmp.lt.s32.totalorder %s20, 0
      %s231 = scalar_select %p230, %s20, 0
      %s232 = smul.addr %s231, 8
      %s233 = scalar_lea.vmem %s1, %s232
      %p234 = scmp.lt.s32.totalorder %s19, 1
      %s235 = scalar_select %p234, %s19, 1
      %p236 = scmp.lt.s32.totalorder %s20, 0
      %s237 = scalar_select %p236, %s20, 0
      %s238 = sadd.s32 %s237, %s235
      %s239 = smul.addr %s238, 4
      %s240 = scalar_lea.vmem %s4, %s239
      %v241 = vld [vmem:[%s229] sm:$0xf]
      %v242 = vunpack.c.l.bf16 %v241
      %v243 = vld [vmem:[%s233] sm:$0xff]
      %v244 = vadd.f32 %v242, %v243
      %vm245 = vcmask 261120
      %v246 = vsel %vm245, %v244, 0.0
      %247 = vadd.xlane.f32.xlu0 %v246
      %v248 = vpop.xlane.xlu0 %247
      %v249 = vrcp.pop 32.0
      %v250 = vmul.f32 32.0, %v249
      %v251 = vsub.f32 1.0, %v250
      %v252 = vmul.f32 %v249, %v251
      %v253 = vadd.f32 %v249, %v252
      %vm254 = vweird.f32 %v249
      %v255 = vsel %vm254, %v249, %v253
      %v256 = vmul.f32 %v248, %v255
      %v257 = vsub.f32 %v244, %v256
      %v258 = vmul.f32 %v257, %v257
      %v259 = vsel %vm245, %v258, 0.0
      %260 = vadd.xlane.f32.xlu0 %v259
      %v261 = vpop.xlane.xlu0 %260
      %v262 = vmul.f32 %v261, %v255
      %v263 = vadd.f32 %v262, 1e-05
      %v264 = vrsqrt.pop %v263
      %v265 = vmul.f32 %v264, %v263
      %v266 = vmul.f32 %v265, %v264
      %v267 = vmul.f32 0.5, %v266
      %v268 = vsub.f32 1.5, %v267
      %v269 = vmul.f32 %v264, %v268
      %vm270 = vweird.f32 %v263
      %vm271 = vweird.f32 %v264
      %vm272 = vmor %vm270, %vm271
      %v273 = vsel %vm272, %v264, %v269
      %v274 = vmul.f32 %v257, %v273
      %v275 = vld [vmem:[%s2] sm:$0x1]
      %v277 = vperm.slane %v275, 0
      %v279 = vmul.f32 %v274, %v277
      %v280 = vld [vmem:[%s3] sm:$0x1]
      %v282 = vperm.slane %v280, 0
      %v284 = vadd.f32 %v279, %v282
      %v285 = vpack.c.bf16 %v284, %v284
      %vm286 = vcmask 257024
      %287 = vst.msk [vmem:[%s240] sm:$0xf] %vm286, %v285
      %p288 = scmp.lt.s32.totalorder %s19, 1
      %s289 = scalar_select %p288, %s19, 1
      %p290 = scmp.lt.s32.totalorder %s20, 0
      %s291 = scalar_select %p290, %s20, 0
      %s292 = sadd.s32 %s291, %s289
      %s293 = smul.addr %s292, 4
      %s294 = scalar_lea.vmem %s4, %s293
      // Predicated region
      $region37: #{model_forward.21} parent=35 // pred_check
        %p295 = pneg %p143
      $region38: #{model_forward.21} parent=35 // pred_check_branch
        %297 = sbr.rel (%p295) target = $region40
      $region39: #{model_forward.21} parent=35 // pred_region
        _
      $region40: #{model_forward.21} parent=35 // pred_fallthru
        _
    $region36: #{model_forward.21} parent=5 // pred_fallthru
      _
    %p298 = scmp.le.s32.totalorder 2, %s10
    // Predicated region
    $region41: #{model_forward.21} parent=5 // pred_check
      %p299 = pneg %p298
    $region42: #{model_forward.21} parent=5 // pred_check_branch
      %301 = sbr.rel (%p299) target = $region44
    $region43: #{model_forward.21} parent=5 // pred_region
      %s302 = ssub.s32 %s10, 2
      // Predicated region
      $region45: #{model_forward.21} parent=43 // pred_check
        %p303 = pneg %p149
      $region46: #{model_forward.21} parent=43 // pred_check_branch
        %305 = sbr.rel (%p303) target = $region48
      $region47: #{model_forward.21} parent=43 // pred_region
        %p306 = scmp.lt.s32.totalorder %s21, 1
        %s307 = scalar_select %p306, %s21, 1
        %p308 = scmp.lt.s32.totalorder %s22, 0
        %s309 = scalar_select %p308, %s22, 0
        %s310 = sadd.s32 %s309, %s307
        %s311 = smul.addr %s310, 4
        %s312 = scalar_lea.vmem %s4, %s311
      $region48: #{model_forward.21} parent=43 // pred_fallthru
        _
    $region44: #{model_forward.21} parent=5 // pred_fallthru
      _
  $region6: #{model_forward.21} parent=0 // loop_footer
    %s14 = sadd.s32 1, %s10
  $region7: #{model_forward.21} parent=0 // loop_footer_branch
    %9 = sbr.rel target = $region3
  $region8: #{model_forward.21} parent=0 // loop_exit
    _

// kernel: model_forward.23
$region0: #{model_forward.23}
  #allocation0 [shape = 'u32[]', space=smem, size = 0x4, offset = 0x4, fixed_abs, tag = 'smem constant byte address 0x4 - core index']
  #allocation1 [shape = 'u32[72,128]{1,0:T(1,128)}', space=vmem, size = 0x9000, scoped, tag = 'internal scratch']
  %s0 = inlined_call_operand.vmem [shape: bf16[2,4,8,8], index: 0, kind: input, shape index: {}]
  %s1 = inlined_call_operand.vmem [shape: bf16[2,4,8,8], index: 1, kind: input, shape index: {}]
  %s2 = inlined_call_operand.vmem [shape: bf16[2,4,8,8], index: 2, kind: input, shape index: {}]
  %s3 = inlined_call_operand.vmem [shape: f32[2,1,8], index: 3, kind: input, shape index: {}]
  %s4 = inlined_call_operand.vmem [shape: bf16[2,8,32], index: 4, kind: output, shape index: {}]
  %s5 = sld [smem:[#allocation0]]
  $region49: #{model_forward.23} parent=0
    _
  %s7 = ssub.s32 1, %s5
  %s8 = scalar_select 0, %s7, %s5
  loop: start=0, step=1, limit=4
  $region2: #{model_forward.23} parent=0 // loop_pre_header
    _
  $region3: #{model_forward.23} parent=0 // loop_header
    %s10 = sphi 0, %s14
    %p11 = scmp.ge.s32.totalorder %s10, 4
    %s17 = sphi 0, %s29
    %s18 = sphi 0, %s25
    %s19 = sphi 0, %s17
    %s20 = sphi 0, %s18
    %s21 = sphi 0, %s19
    %s22 = sphi 0, %s20
    %s34 = sphi 0, %s36
    %s37 = sphi 0, %s34
    %s38 = sphi 0, %s37
    %s54 = sphi 0, %s38
    %s62 = sphi 0, %s64
    %s65 = sphi 0, %s62
    %s66 = sphi 0, %s65
    %s82 = sphi 0, %s66
    %s90 = sphi 0, %s92
    %s93 = sphi 0, %s90
    %s94 = sphi 0, %s93
    %s110 = sphi 0, %s94
    %s116 = sphi 0, %s118
    %s119 = sphi 0, %s116
    %s120 = sphi 0, %s119
    %s136 = sphi 0, %s120
    %s144 = sphi 0, %s146
    %s147 = sphi 0, %s144
    %s148 = sphi 0, %s147
    %s164 = sphi 0, %s148
  $region4: #{model_forward.23} parent=0 // loop_header_branch
    %13 = sbr.rel (%p11) target = $region8
  $region5: #{model_forward.23} parent=0 // loop_body
    %s15 = ssub.s32 %s10, 1
    %s16 = ssub.s32 %s10, 2
    %s23 = sadd.s32 1, %s18
    %p24 = scmp.ge.s32.totalorder %s23, 1
    %s25 = scalar_select %p24, 0, %s23
    %s26 = sadd.s32 1, %s17
    %s27 = scalar_select %p24, %s26, %s17
    %p28 = scmp.ge.s32.totalorder %s27, 2
    %s29 = scalar_select %p28, 0, %s27
    %s30 = ssub.s32 %s17, %s29
    %s31 = ssub.s32 %s18, %s25
    %s32 = sor.u32 %s30, %s31
    %p33 = scmp.eq.s32.totalorder %s32, 0
    %s35 = sadd.s32 %s34, 1
    %s36 = scalar_select %p33, %s34, %s35
    %p39 = pneg %p33
    %p40 = scmp.eq.s32.totalorder %s10, 1
    %p41 = por %p39, %p40
    %p42 = scmp.ne.s32.totalorder %s34, %s37
    %p43 = scmp.eq.s32.totalorder %s10, 0
    %p44 = por %p42, %p43
    %p45 = scmp.ne.s32.totalorder %s34, %s37
    %p46 = scmp.eq.s32.totalorder %s15, 1
    %p47 = por %p45, %p46
    %p48 = scmp.ne.s32.totalorder %s37, %s38
    %p49 = scmp.eq.s32.totalorder %s15, 0
    %p50 = por %p48, %p49
    %p51 = scmp.ne.s32.totalorder %s37, %s38
    %p52 = scmp.eq.s32.totalorder %s16, 1
    %p53 = por %p51, %p52
    %p55 = scmp.ne.s32.totalorder %s38, %s54
    %p56 = scmp.eq.s32.totalorder %s16, 0
    %p57 = por %p55, %p56
    %s58 = ssub.s32 %s17, %s29
    %s59 = ssub.s32 %s18, %s25
    %s60 = sor.u32 %s58, %s59
    %p61 = scmp.eq.s32.totalorder %s60, 0
    %s63 = sadd.s32 %s62, 1
    %s64 = scalar_select %p61, %s62, %s63
    %p67 = pneg %p61
    %p68 = scmp.eq.s32.totalorder %s10, 1
    %p69 = por %p67, %p68
    %p70 = scmp.ne.s32.totalorder %s62, %s65
    %p71 = scmp.eq.s32.totalorder %s10, 0
    %p72 = por %p70, %p71
    %p73 = scmp.ne.s32.totalorder %s62, %s65
    %p74 = scmp.eq.s32.totalorder %s15, 1
    %p75 = por %p73, %p74
    %p76 = scmp.ne.s32.totalorder %s65, %s66
    %p77 = scmp.eq.s32.totalorder %s15, 0
    %p78 = por %p76, %p77
    %p79 = scmp.ne.s32.totalorder %s65, %s66
    %p80 = scmp.eq.s32.totalorder %s16, 1
    %p81 = por %p79, %p80
    %p83 = scmp.ne.s32.totalorder %s66, %s82
    %p84 = scmp.eq.s32.totalorder %s16, 0
    %p85 = por %p83, %p84
    %s86 = ssub.s32 %s17, %s29
    %s87 = ssub.s32 %s18, %s25
    %s88 = sor.u32 %s86, %s87
    %p89 = scmp.eq.s32.totalorder %s88, 0
    %s91 = sadd.s32 %s90, 1
    %s92 = scalar_select %p89, %s90, %s91
    %p95 = pneg %p89
    %p96 = scmp.eq.s32.totalorder %s10, 1
    %p97 = por %p95, %p96
    %p98 = scmp.ne.s32.totalorder %s90, %s93
    %p99 = scmp.eq.s32.totalorder %s10, 0
    %p100 = por %p98, %p99
    %p101 = scmp.ne.s32.totalorder %s90, %s93
    %p102 = scmp.eq.s32.totalorder %s15, 1
    %p103 = por %p101, %p102
    %p104 = scmp.ne.s32.totalorder %s93, %s94
    %p105 = scmp.eq.s32.totalorder %s15, 0
    %p106 = por %p104, %p105
    %p107 = scmp.ne.s32.totalorder %s93, %s94
    %p108 = scmp.eq.s32.totalorder %s16, 1
    %p109 = por %p107, %p108
    %p111 = scmp.ne.s32.totalorder %s94, %s110
    %p112 = scmp.eq.s32.totalorder %s16, 0
    %p113 = por %p111, %p112
    %s114 = ssub.s32 %s17, %s29
    %p115 = scmp.eq.s32.totalorder %s114, 0
    %s117 = sadd.s32 %s116, 1
    %s118 = scalar_select %p115, %s116, %s117
    %p121 = pneg %p115
    %p122 = scmp.eq.s32.totalorder %s10, 1
    %p123 = por %p121, %p122
    %p124 = scmp.ne.s32.totalorder %s116, %s119
    %p125 = scmp.eq.s32.totalorder %s10, 0
    %p126 = por %p124, %p125
    %p127 = scmp.ne.s32.totalorder %s116, %s119
    %p128 = scmp.eq.s32.totalorder %s15, 1
    %p129 = por %p127, %p128
    %p130 = scmp.ne.s32.totalorder %s119, %s120
    %p131 = scmp.eq.s32.totalorder %s15, 0
    %p132 = por %p130, %p131
    %p133 = scmp.ne.s32.totalorder %s119, %s120
    %p134 = scmp.eq.s32.totalorder %s16, 1
    %p135 = por %p133, %p134
    %p137 = scmp.ne.s32.totalorder %s120, %s136
    %p138 = scmp.eq.s32.totalorder %s16, 0
    %p139 = por %p137, %p138
    %s140 = ssub.s32 %s17, %s29
    %s141 = ssub.s32 %s18, %s25
    %s142 = sor.u32 %s140, %s141
    %p143 = scmp.eq.s32.totalorder %s142, 0
    %s145 = sadd.s32 %s144, 1
    %s146 = scalar_select %p143, %s144, %s145
    %p149 = pneg %p143
    %p150 = scmp.eq.s32.totalorder %s10, 1
    %p151 = por %p149, %p150
    %p152 = scmp.ne.s32.totalorder %s144, %s147
    %p153 = scmp.eq.s32.totalorder %s10, 0
    %p154 = por %p152, %p153
    %p155 = scmp.ne.s32.totalorder %s144, %s147
    %p156 = scmp.eq.s32.totalorder %s15, 1
    %p157 = por %p155, %p156
    %p158 = scmp.ne.s32.totalorder %s147, %s148
    %p159 = scmp.eq.s32.totalorder %s15, 0
    %p160 = por %p158, %p159
    %p161 = scmp.ne.s32.totalorder %s147, %s148
    %p162 = scmp.eq.s32.totalorder %s16, 1
    %p163 = por %p161, %p162
    %p165 = scmp.ne.s32.totalorder %s148, %s164
    %p166 = scmp.eq.s32.totalorder %s16, 0
    %p167 = por %p165, %p166
    %p168 = scmp.le.s32.totalorder 1, %s10
    %p169 = scmp.lt.s32.totalorder %s10, 3
    %p170 = pnand %p168, %p169
    %p171 = pneg %p170
    // Predicated region
    $region9: #{model_forward.23} parent=5 // pred_check
      _
    $region10: #{model_forward.23} parent=5 // pred_check_branch
      %173 = sbr.rel (%p170) target = $region12
    $region11: #{model_forward.23} parent=5 // pred_region
      %s174 = ssub.s32 %s10, 1
    $region12: #{model_forward.23} parent=5 // pred_fallthru
      _
    %p175 = scmp.lt.s32.totalorder %s10, 2
    // Predicated region
    $region13: #{model_forward.23} parent=5 // pred_check
      %p176 = pneg %p175
    $region14: #{model_forward.23} parent=5 // pred_check_branch
      %178 = sbr.rel (%p176) target = $region16
    $region15: #{model_forward.23} parent=5 // pred_region
      // Predicated region
      $region17: #{model_forward.23} parent=15 // pred_check
        %p179 = pneg %p44
      $region18: #{model_forward.23} parent=15 // pred_check_branch
        %181 = sbr.rel (%p179) target = $region20
      $region19: #{model_forward.23} parent=15 // pred_region
        %s182 = smul.u32 4, %s18
        %p183 = scmp.lt.s32.totalorder %s17, 1
        %s184 = scalar_select %p183, %s17, 1
        %p185 = scmp.lt.s32.totalorder %s182, 3
        %s186 = scalar_select %p185, %s182, 3
        %s187 = smul.addr %s184, 4
        %s188 = sadd.s32 %s186, %s187
        %s189 = smul.addr %s188, 4
        %s190 = scalar_lea.vmem %s0, %s189
        %s191 = smul.u32 4, %s18
      $region20: #{model_forward.23} parent=15 // pred_fallthru
        _
      // Predicated region
      $region21: #{model_forward.23} parent=15 // pred_check
        %p192 = pneg %p72
      $region22: #{model_forward.23} parent=15 // pred_check_branch
        %194 = sbr.rel (%p192) target = $region24
      $region23: #{model_forward.23} parent=15 // pred_region
        %s195 = smul.u32 4, %s18
        %p196 = scmp.lt.s32.totalorder %s17, 1
        %s197 = scalar_select %p196, %s17, 1
        %p198 = scmp.lt.s32.totalorder %s195, 3
        %s199 = scalar_select %p198, %s195, 3
        %s200 = smul.addr %s197, 4
        %s201 = sadd.s32 %s199, %s200
        %s202 = smul.addr %s201, 4
        %s203 = scalar_lea.vmem %s1, %s202
        %s204 = smul.u32 4, %s18
      $region24: #{model_forward.23} parent=15 // pred_fallthru
        _
      // Predicated region
      $region25: #{model_forward.23} parent=15 // pred_check
        %p205 = pneg %p100
      $region26: #{model_forward.23} parent=15 // pred_check_branch
        %207 = sbr.rel (%p205) target = $region28
      $region27: #{model_forward.23} parent=15 // pred_region
        %s208 = smul.u32 4, %s18
        %p209 = scmp.lt.s32.totalorder %s17, 1
        %s210 = scalar_select %p209, %s17, 1
        %p211 = scmp.lt.s32.totalorder %s208, 3
        %s212 = scalar_select %p211, %s208, 3
        %s213 = smul.addr %s210, 4
        %s214 = sadd.s32 %s212, %s213
        %s215 = smul.addr %s214, 4
        %s216 = scalar_lea.vmem %s2, %s215
        %s217 = smul.u32 4, %s18
      $region28: #{model_forward.23} parent=15 // pred_fallthru
        _
      // Predicated region
      $region29: #{model_forward.23} parent=15 // pred_check
        %p218 = pneg %p126
      $region30: #{model_forward.23} parent=15 // pred_check_branch
        %220 = sbr.rel (%p218) target = $region32
      $region31: #{model_forward.23} parent=15 // pred_region
        %p221 = scmp.lt.s32.totalorder %s17, 1
        %s222 = scalar_select %p221, %s17, 1
        %s223 = scalar_lea.vmem %s3, %s222
      $region32: #{model_forward.23} parent=15 // pred_fallthru
        _
    $region16: #{model_forward.23} parent=5 // pred_fallthru
      _
    %p224 = scmp.le.s32.totalorder 1, %s10
    %p225 = scmp.lt.s32.totalorder %s10, 3
    %p226 = pnand %p224, %p225
    %p227 = pneg %p226
    // Predicated region
    $region33: #{model_forward.23} parent=5 // pred_check
      _
    $region34: #{model_forward.23} parent=5 // pred_check_branch
      %229 = sbr.rel (%p226) target = $region36
    $region35: #{model_forward.23} parent=5 // pred_region
      %s230 = ssub.s32 %s10, 1
      %s231 = smul.u32 4, %s20
      %p232 = scmp.lt.s32.totalorder %s19, 1
      %s233 = scalar_select %p232, %s19, 1
      %p234 = scmp.lt.s32.totalorder %s231, 3
      %s235 = scalar_select %p234, %s231, 3
      %s236 = smul.addr %s233, 4
      %s237 = sadd.s32 %s235, %s236
      %s238 = smul.addr %s237, 4
      %s239 = scalar_lea.vmem %s0, %s238
      %p240 = pneg %p50
      %p241 = pneg %p47
      %s242 = smul.u32 4, %s20
      %p243 = scmp.lt.s32.totalorder %s19, 1
      %s244 = scalar_select %p243, %s19, 1
      %p245 = scmp.lt.s32.totalorder %s242, 3
      %s246 = scalar_select %p245, %s242, 3
      %s247 = smul.addr %s244, 4
      %s248 = sadd.s32 %s246, %s247
      %s249 = smul.addr %s248, 4
      %s250 = scalar_lea.vmem %s1, %s249
      %p251 = pneg %p78
      %p252 = pneg %p75
      %s253 = smul.u32 4, %s20
      %p254 = scmp.lt.s32.totalorder %s19, 1
      %s255 = scalar_select %p254, %s19, 1
      %p256 = scmp.lt.s32.totalorder %s253, 3
      %s257 = scalar_select %p256, %s253, 3
      %s258 = smul.addr %s255, 4
      %s259 = sadd.s32 %s257, %s258
      %s260 = smul.addr %s259, 4
      %s261 = scalar_lea.vmem %s2, %s260
      %p262 = pneg %p106
      %p263 = pneg %p103
      %p264 = scmp.lt.s32.totalorder %s19, 1
      %s265 = scalar_select %p264, %s19, 1
      %s266 = scalar_lea.vmem %s3, %s265
      %p267 = pneg %p132
      %p268 = pneg %p129
      %p269 = pneg %p160
      %p270 = pneg %p157
      %p271 = scmp.lt.s32.totalorder %s19, 1
      %s272 = scalar_select %p271, %s19, 1
      %p273 = scmp.lt.s32.totalorder %s20, 0
      %s274 = scalar_select %p273, %s20, 0
      %s275 = sadd.s32 %s274, %s272
      %s276 = smul.addr %s275, 4
      %s277 = scalar_lea.vmem %s4, %s276
      %s278 = smul.u32 4, %s20
      %p279 = scmp.lt.s32.totalorder %s19, 1
      %s280 = scalar_select %p279, %s19, 1
      %p281 = scmp.lt.s32.totalorder %s278, 3
      %s282 = scalar_select %p281, %s278, 3
      %s283 = smul.addr %s280, 4
      %s284 = sadd.s32 %s282, %s283
      %s285 = smul.addr %s284, 4
      %s286 = scalar_lea.vmem %s0, %s285
      %s287 = smul.u32 4, %s20
      %s288 = smul.u32 4, %s20
      %p289 = scmp.lt.s32.totalorder %s19, 1
      %s290 = scalar_select %p289, %s19, 1
      %p291 = scmp.lt.s32.totalorder %s288, 3
      %s292 = scalar_select %p291, %s288, 3
      %s293 = smul.addr %s290, 4
      %s294 = sadd.s32 %s292, %s293
      %s295 = smul.addr %s294, 4
      %s296 = scalar_lea.vmem %s1, %s295
      %s297 = smul.u32 4, %s20
      %s298 = smul.u32 4, %s20
      %p299 = scmp.lt.s32.totalorder %s19, 1
      %s300 = scalar_select %p299, %s19, 1
      %p301 = scmp.lt.s32.totalorder %s298, 3
      %s302 = scalar_select %p301, %s298, 3
      %s303 = smul.addr %s300, 4
      %s304 = sadd.s32 %s302, %s303
      %s305 = smul.addr %s304, 4
      %s306 = scalar_lea.vmem %s2, %s305
      %s307 = smul.u32 4, %s20
      %p308 = scmp.lt.s32.totalorder %s19, 1
      %s309 = scalar_select %p308, %s19, 1
      %s310 = scalar_lea.vmem %s3, %s309
      %p311 = scmp.lt.s32.totalorder %s19, 1
      %s312 = scalar_select %p311, %s19, 1
      %p313 = scmp.lt.s32.totalorder %s20, 0
      %s314 = scalar_select %p313, %s20, 0
      %s315 = sadd.s32 %s314, %s312
      %s316 = smul.addr %s315, 4
      %s317 = scalar_lea.vmem %s4, %s316
      %v319 = vld [vmem:[%s310] sm:$0x1]
      %v320 = vld [vmem:[%s286] sm:$0xf]
      %v321 = vunpack.c.l.bf16 %v320
      %v322 = vmul.f32 %v321, 0.35351563
      %v323 = vpack.c.bf16 %v322, %v322
      %v324 = vld [vmem:[%s296] sm:$0xf]
      %v325 = vld [vmem:[%s306] sm:$0xf]
      %v327 = vperm.slane %v319, 0
      %vm329 = vcmask 64512
      %v331 = vsel %vm329, %v323, 0
      %v334 = vsel %vm329, %v324, 0
      %336 = vmatpush.bf16.xpose.msra.mxu0 0
      %337 = vmatpush.bf16.xpose.msra.mxu0 0
      %338 = vmatpush.bf16.xpose.msra.mxu0 0
      %339 = vmatpush.bf16.xpose.msra.mxu0 0
      %340 = vmatpush.bf16.xpose.msra.mxu0 0
      %341 = vmatpush.bf16.xpose.msra.mxu0 0
      %342 = vmatpush.bf16.xpose.msra.mxu0 0
      %343 = vmatpush.bf16.xpose.msra.mxu0 %v334
      %344 = vmatmul.bf16.gmra.mxu0 %v331
      %v345 = vpop.f32.mrf.mxu0
      %v346 = vadd.f32 %v327, %v345
      %v347 = vpop.f32.mrf.mxu0
      %348 = vdwg.mxu0
      %v349 = vsel %vm329, %v346, -inf
      %350 = vmax.xlane.f32.xlu0 %v349
      %v351 = vpop.xlane.xlu0 %350
      %v352 = vsub.f32 %v346, %v351
      %v353 = vmul.f32 %v352, 1.442695
      %v354 = vpow.pop %v353
      %v355 = vsel %vm329, %v354, 0.0
      %356 = vadd.xlane.f32.xlu0 %v355
      %v357 = vpop.xlane.xlu0 %356
      %v358 = vrcp.pop %v357
      %v359 = vmul.f32 %v357, %v358
      %v360 = vsub.f32 1.0, %v359
      %v361 = vmul.f32 %v358, %v360
      %v362 = vadd.f32 %v358, %v361
      %vm363 = vweird.f32 %v357
      %vm364 = vweird.f32 %v358
      %vm365 = vmor %vm363, %vm364
      %v366 = vsel %vm365, %v358, %v362
      %v367 = vand.u32 2147483647, %v357
      %vm368 = vcmp.eq.f32.partialorder %v367, 8.507059e+37
      %v369 = vand.u32 %v357, 2147483648
      %v370 = vor.u32 1.1754944e-38, %v369
      %v371 = vsel %vm368, %v370, %v366
      %v372 = vmul.f32 %v354, %v371
      %v373 = vpack.c.bf16 %v372, %v372
      %v375 = vsel %vm329, %v373, 0
      %vm377 = vcmask 1043456
      %v379 = vsel %vm377, %v325, 0
      %381 = vmatpush.bf16.msra.mxu0 0
      %382 = vmatpush.bf16.msra.mxu0 0
      %383 = vmatpush.bf16.msra.mxu0 0
      %384 = vmatpush.bf16.msra.mxu0 0
      %385 = vmatpush.bf16.msra.mxu0 0
      %386 = vmatpush.bf16.msra.mxu0 0
      %387 = vmatpush.bf16.msra.mxu0 0
      %388 = vmatpush.bf16.msra.mxu0 %v379
      %389 = vmatmul.bf16.gmra.mxu0 %v375
      %v390 = vpop.f32.mrf.mxu0
      %v391 = vadd.f32 0.0, %v390
      %v392 = vpop.f32.mrf.mxu0
      %393 = vdwg.mxu0
      %s394 = scalar_lea.vmem %s286, 4
      %v395 = vld [vmem:[%s394] sm:$0xf]
      %v396 = vunpack.c.l.bf16 %v395
      %v397 = vmul.f32 %v396, 0.35351563
      %v398 = vpack.c.bf16 %v397, %v397
      %s399 = scalar_lea.vmem %s296, 4
      %v400 = vld [vmem:[%s399] sm:$0xf]
      %s401 = scalar_lea.vmem %s306, 4
      %v402 = vld [vmem:[%s401] sm:$0xf]
      %v404 = vsel %vm329, %v398, 0
      %v407 = vsel %vm329, %v400, 0
      %409 = vmatpush.bf16.xpose.msra.mxu0 0
      %410 = vmatpush.bf16.xpose.msra.mxu0 0
      %411 = vmatpush.bf16.xpose.msra.mxu0 0
      %412 = vmatpush.bf16.xpose.msra.mxu0 0
      %413 = vmatpush.bf16.xpose.msra.mxu0 0
      %414 = vmatpush.bf16.xpose.msra.mxu0 0
      %415 = vmatpush.bf16.xpose.msra.mxu0 0
      %416 = vmatpush.bf16.xpose.msra.mxu0 %v407
      %417 = vmatmul.bf16.gmra.mxu0 %v404
      %v418 = vpop.f32.mrf.mxu0
      %v419 = vadd.f32 %v327, %v418
      %v420 = vpop.f32.mrf.mxu0
      %421 = vdwg.mxu0
      %v422 = vsel %vm329, %v419, -inf
      %423 = vmax.xlane.f32.xlu0 %v422
      %v424 = vpop.xlane.xlu0 %423
      %v425 = vsub.f32 %v419, %v424
      %v426 = vmul.f32 %v425, 1.442695
      %v427 = vpow.pop %v426
      %v428 = vsel %vm329, %v427, 0.0
      %429 = vadd.xlane.f32.xlu0 %v428
      %v430 = vpop.xlane.xlu0 %429
      %v431 = vrcp.pop %v430
      %v432 = vmul.f32 %v430, %v431
      %v433 = vsub.f32 1.0, %v432
      %v434 = vmul.f32 %v431, %v433
      %v435 = vadd.f32 %v431, %v434
      %vm436 = vweird.f32 %v430
      %vm437 = vweird.f32 %v431
      %vm438 = vmor %vm436, %vm437
      %v439 = vsel %vm438, %v431, %v435
      %v440 = vand.u32 2147483647, %v430
      %vm441 = vcmp.eq.f32.partialorder %v440, 8.507059e+37
      %v442 = vand.u32 %v430, 2147483648
      %v443 = vor.u32 1.1754944e-38, %v442
      %v444 = vsel %vm441, %v443, %v439
      %v445 = vmul.f32 %v427, %v444
      %v446 = vpack.c.bf16 %v445, %v445
      %v448 = vsel %vm329, %v446, 0
      %v451 = vsel %vm377, %v402, 0
      %453 = vmatpush.bf16.msra.mxu0 0
      %454 = vmatpush.bf16.msra.mxu0 0
      %455 = vmatpush.bf16.msra.mxu0 0
      %456 = vmatpush.bf16.msra.mxu0 0
      %457 = vmatpush.bf16.msra.mxu0 0
      %458 = vmatpush.bf16.msra.mxu0 0
      %459 = vmatpush.bf16.msra.mxu0 0
      %460 = vmatpush.bf16.msra.mxu0 %v451
      %461 = vmatmul.bf16.gmra.mxu0 %v448
      %v462 = vpop.f32.mrf.mxu0
      %v463 = vadd.f32 0.0, %v462
      %v464 = vpop.f32.mrf.mxu0
      %465 = vdwg.mxu0
      %s466 = scalar_lea.vmem %s286, 8
      %v467 = vld [vmem:[%s466] sm:$0xf]
      %v468 = vunpack.c.l.bf16 %v467
      %v469 = vmul.f32 %v468, 0.35351563
      %v470 = vpack.c.bf16 %v469, %v469
      %s471 = scalar_lea.vmem %s296, 8
      %v472 = vld [vmem:[%s471] sm:$0xf]
      %s473 = scalar_lea.vmem %s306, 8
      %v474 = vld [vmem:[%s473] sm:$0xf]
      %v476 = vsel %vm329, %v470, 0
      %v479 = vsel %vm329, %v472, 0
      %481 = vmatpush.bf16.xpose.msra.mxu0 0
      %482 = vmatpush.bf16.xpose.msra.mxu0 0
      %483 = vmatpush.bf16.xpose.msra.mxu0 0
      %484 = vmatpush.bf16.xpose.msra.mxu0 0
      %485 = vmatpush.bf16.xpose.msra.mxu0 0
      %486 = vmatpush.bf16.xpose.msra.mxu0 0
      %487 = vmatpush.bf16.xpose.msra.mxu0 0
      %488 = vmatpush.bf16.xpose.msra.mxu0 %v479
      %489 = vmatmul.bf16.gmra.mxu0 %v476
      %v490 = vpop.f32.mrf.mxu0
      %v491 = vadd.f32 %v327, %v490
      %v492 = vpop.f32.mrf.mxu0
      %493 = vdwg.mxu0
      %v494 = vsel %vm329, %v491, -inf
      %495 = vmax.xlane.f32.xlu0 %v494
      %v496 = vpop.xlane.xlu0 %495
      %v497 = vsub.f32 %v491, %v496
      %v498 = vmul.f32 %v497, 1.442695
      %v499 = vpow.pop %v498
      %v500 = vsel %vm329, %v499, 0.0
      %501 = vadd.xlane.f32.xlu0 %v500
      %v502 = vpop.xlane.xlu0 %501
      %v503 = vrcp.pop %v502
      %v504 = vmul.f32 %v502, %v503
      %v505 = vsub.f32 1.0, %v504
      %v506 = vmul.f32 %v503, %v505
      %v507 = vadd.f32 %v503, %v506
      %vm508 = vweird.f32 %v502
      %vm509 = vweird.f32 %v503
      %vm510 = vmor %vm508, %vm509
      %v511 = vsel %vm510, %v503, %v507
      %v512 = vand.u32 2147483647, %v502
      %vm513 = vcmp.eq.f32.partialorder %v512, 8.507059e+37
      %v514 = vand.u32 %v502, 2147483648
      %v515 = vor.u32 1.1754944e-38, %v514
      %v516 = vsel %vm513, %v515, %v511
      %v517 = vmul.f32 %v499, %v516
      %v518 = vpack.c.bf16 %v517, %v517
      %v520 = vsel %vm329, %v518, 0
      %v523 = vsel %vm377, %v474, 0
      %525 = vmatpush.bf16.msra.mxu0 0
      %526 = vmatpush.bf16.msra.mxu0 0
      %527 = vmatpush.bf16.msra.mxu0 0
      %528 = vmatpush.bf16.msra.mxu0 0
      %529 = vmatpush.bf16.msra.mxu0 0
      %530 = vmatpush.bf16.msra.mxu0 0
      %531 = vmatpush.bf16.msra.mxu0 0
      %532 = vmatpush.bf16.msra.mxu0 %v523
      %533 = vmatmul.bf16.gmra.mxu0 %v520
      %v534 = vpop.f32.mrf.mxu0
      %v535 = vadd.f32 0.0, %v534
      %v536 = vpop.f32.mrf.mxu0
      %537 = vdwg.mxu0
      %s538 = scalar_lea.vmem %s286, 12
      %v539 = vld [vmem:[%s538] sm:$0xf]
      %v540 = vunpack.c.l.bf16 %v539
      %v541 = vmul.f32 %v540, 0.35351563
      %v542 = vpack.c.bf16 %v541, %v541
      %s543 = scalar_lea.vmem %s296, 12
      %v544 = vld [vmem:[%s543] sm:$0xf]
      %s545 = scalar_lea.vmem %s306, 12
      %v546 = vld [vmem:[%s545] sm:$0xf]
      %v548 = vsel %vm329, %v542, 0
      %v551 = vsel %vm329, %v544, 0
      %553 = vmatpush.bf16.xpose.msra.mxu0 0
      %554 = vmatpush.bf16.xpose.msra.mxu0 0
      %555 = vmatpush.bf16.xpose.msra.mxu0 0
      %556 = vmatpush.bf16.xpose.msra.mxu0 0
      %557 = vmatpush.bf16.xpose.msra.mxu0 0
      %558 = vmatpush.bf16.xpose.msra.mxu0 0
      %559 = vmatpush.bf16.xpose.msra.mxu0 0
      %560 = vmatpush.bf16.xpose.msra.mxu0 %v551
      %561 = vmatmul.bf16.gmra.mxu0 %v548
      %v562 = vpop.f32.mrf.mxu0
      %v563 = vadd.f32 %v327, %v562
      %v564 = vpop.f32.mrf.mxu0
      %565 = vdwg.mxu0
      %v566 = vsel %vm329, %v563, -inf
      %567 = vmax.xlane.f32.xlu0 %v566
      %v568 = vpop.xlane.xlu0 %567
      %v569 = vsub.f32 %v563, %v568
      %v570 = vmul.f32 %v569, 1.442695
      %v571 = vpow.pop %v570
      %v572 = vsel %vm329, %v571, 0.0
      %573 = vadd.xlane.f32.xlu0 %v572
      %v574 = vpop.xlane.xlu0 %573
      %v575 = vrcp.pop %v574
      %v576 = vmul.f32 %v574, %v575
      %v577 = vsub.f32 1.0, %v576
      %v578 = vmul.f32 %v575, %v577
      %v579 = vadd.f32 %v575, %v578
      %vm580 = vweird.f32 %v574
      %vm581 = vweird.f32 %v575
      %vm582 = vmor %vm580, %vm581
      %v583 = vsel %vm582, %v575, %v579
      %v584 = vand.u32 2147483647, %v574
      %vm585 = vcmp.eq.f32.partialorder %v584, 8.507059e+37
      %v586 = vand.u32 %v574, 2147483648
      %v587 = vor.u32 1.1754944e-38, %v586
      %v588 = vsel %vm585, %v587, %v583
      %v589 = vmul.f32 %v571, %v588
      %v590 = vpack.c.bf16 %v589, %v589
      %v592 = vsel %vm329, %v590, 0
      %v595 = vsel %vm377, %v546, 0
      %597 = vmatpush.bf16.msra.mxu0 0
      %598 = vmatpush.bf16.msra.mxu0 0
      %599 = vmatpush.bf16.msra.mxu0 0
      %600 = vmatpush.bf16.msra.mxu0 0
      %601 = vmatpush.bf16.msra.mxu0 0
      %602 = vmatpush.bf16.msra.mxu0 0
      %603 = vmatpush.bf16.msra.mxu0 0
      %604 = vmatpush.bf16.msra.mxu0 %v595
      %605 = vmatmul.bf16.gmra.mxu0 %v592
      %v606 = vpop.f32.mrf.mxu0
      %v607 = vadd.f32 0.0, %v606
      %v608 = vpop.f32.mrf.mxu0
      %609 = vdwg.mxu0
      %611 = vrot.lane.b32.xlu0 %v463, 8
      %v612 = vpop.permute.xlu0 %611
      %615 = vrot.lane.b32.xlu0 %v535, 16
      %v616 = vpop.permute.xlu0 %615
      %619 = vrot.lane.b32.xlu0 %v607, 24
      %v620 = vpop.permute.xlu0 %619
      %v622 = vsel %vm329, %v391, %v612
      %vm623 = vcmask 130048
      %v624 = vsel %vm623, %v622, %v616
      %vm625 = vcmask 195584
      %v626 = vsel %vm625, %v624, %v620
      %v627 = vpack.c.bf16 %v626, %v626
      %vm628 = vcmask 257024
      %629 = vst.msk [vmem:[%s317] sm:$0xf] %vm628, %v627
      %p630 = scmp.lt.s32.totalorder %s19, 1
      %s631 = scalar_select %p630, %s19, 1
      %p632 = scmp.lt.s32.totalorder %s20, 0
      %s633 = scalar_select %p632, %s20, 0
      %s634 = sadd.s32 %s633, %s631
      %s635 = smul.addr %s634, 4
      %s636 = scalar_lea.vmem %s4, %s635
      // Predicated region
      $region37: #{model_forward.23} parent=35 // pred_check
        %p637 = pneg %p157
      $region38: #{model_forward.23} parent=35 // pred_check_branch
        %639 = sbr.rel (%p637) target = $region40
      $region39: #{model_forward.23} parent=35 // pred_region
        _
      $region40: #{model_forward.23} parent=35 // pred_fallthru
        _
    $region36: #{model_forward.23} parent=5 // pred_fallthru
      _
    %p640 = scmp.le.s32.totalorder 2, %s10
    // Predicated region
    $region41: #{model_forward.23} parent=5 // pred_check
      %p641 = pneg %p640
    $region42: #{model_forward.23} parent=5 // pred_check_branch
      %643 = sbr.rel (%p641) target = $region44
    $region43: #{model_forward.23} parent=5 // pred_region
      %s644 = ssub.s32 %s10, 2
      // Predicated region
      $region45: #{model_forward.23} parent=43 // pred_check
        %p645 = pneg %p163
      $region46: #{model_forward.23} parent=43 // pred_check_branch
        %647 = sbr.rel (%p645) target = $region48
      $region47: #{model_forward.23} parent=43 // pred_region
        %p648 = scmp.lt.s32.totalorder %s21, 1
        %s649 = scalar_select %p648, %s21, 1
        %p650 = scmp.lt.s32.totalorder %s22, 0
        %s651 = scalar_select %p650, %s22, 0
        %s652 = sadd.s32 %s651, %s649
        %s653 = smul.addr %s652, 4
        %s654 = scalar_lea.vmem %s4, %s653
      $region48: #{model_forward.23} parent=43 // pred_fallthru
        _
    $region44: #{model_forward.23} parent=5 // pred_fallthru
      _
  $region6: #{model_forward.23} parent=0 // loop_footer
    %s14 = sadd.s32 1, %s10
  $region7: #{model_forward.23} parent=0 // loop_footer_branch
    %9 = sbr.rel target = $region3
  $region8: #{model_forward.23} parent=0 // loop_exit
    _

// kernel: model_forward.22
$region0: #{model_forward.22}
  #allocation0 [shape = 'u32[]', space=smem, size = 0x4, offset = 0x4, fixed_abs, tag = 'smem constant byte address 0x4 - core index']
  #allocation1 [shape = 'u32[72,128]{1,0:T(1,128)}', space=vmem, size = 0x9000, scoped, tag = 'internal scratch']
  #allocation2 [shape = 'f32[16,96]{1,0:T(8,128)}', space=vmem, size = 0x2000, scoped, tag = 'scratch operand']
  %s0 = inlined_call_operand.vmem [shape: bf16[16,32], index: 0, kind: input, shape index: {}]
  %s1 = inlined_call_operand.vmem [shape: bf16[32,96], index: 1, kind: input, shape index: {}]
  %s2 = inlined_call_operand.vmem [shape: f32[1,96], index: 2, kind: input, shape index: {}]
  %s3 = inlined_call_operand.vmem [shape: bf16[16,96], index: 3, kind: output, shape index: {}]
  %s4 = sld [smem:[#allocation0]]
  $region30: #{model_forward.22} parent=0
    _
  %s6 = ssub.s32 1, %s4
  %s7 = scalar_select 0, %s6, %s4
  // Predicated region
  $region2: #{model_forward.22} parent=0 // pred_check
    _
  $region3: #{model_forward.22} parent=0 // pred_check_branch
    %9 = sbr.rel (0) target = $region5
  $region4: #{model_forward.22} parent=0 // pred_region
    _
  $region5: #{model_forward.22} parent=0 // pred_fallthru
    _
  // Predicated region
  $region6: #{model_forward.22} parent=0 // pred_check
    _
  $region7: #{model_forward.22} parent=0 // pred_check_branch
    %11 = sbr.rel (0) target = $region9
  $region8: #{model_forward.22} parent=0 // pred_region
    _
  $region9: #{model_forward.22} parent=0 // pred_fallthru
    _
  // Predicated region
  $region10: #{model_forward.22} parent=0 // pred_check
    _
  $region11: #{model_forward.22} parent=0 // pred_check_branch
    %13 = sbr.rel (0) target = $region13
  $region12: #{model_forward.22} parent=0 // pred_region
    _
  $region13: #{model_forward.22} parent=0 // pred_fallthru
    _
  %p15 = scmp.eq.s32.totalorder 0, 0
  // Predicated region
  $region14: #{model_forward.22} parent=0 // pred_check
    %p16 = pneg %p15
  $region15: #{model_forward.22} parent=0 // pred_check_branch
    %18 = sbr.rel (%p16) target = $region17
  $region16: #{model_forward.22} parent=0 // pred_region
    %vm19 = vcmask 785408
    %20 = vst.msk [vmem:[#allocation2] sm:$0xff] %vm19, 0.0
    %21 = vst.msk [vmem:[#allocation2 + $0x8] sm:$0xff] %vm19, 0.0
  $region17: #{model_forward.22} parent=0 // pred_fallthru
    _
  %v22 = vld [vmem:[#allocation2] sm:$0xff]
  %v23 = vld [vmem:[#allocation2 + $0x8] sm:$0xff]
  %v24 = vld [vmem:[%s0] sm:$0xf]
  %v25 = vld [vmem:[%s0 + $0x4] sm:$0xf]
  %v26 = vld [vmem:[%s1] sm:$0xf]
  %v27 = vld [vmem:[%s1 + $0x4] sm:$0xf]
  %v28 = vld [vmem:[%s1 + $0x8] sm:$0xf]
  %v29 = vld [vmem:[%s1 + $0xc] sm:$0xf]
  %v32 = vunpack.c.l.b16 %v24
  %v33 = vunpack.c.l.b16 %v25
  %v34 = vpack.c.b16 %v33, %v32
  %v39 = vunpack.c.l.b16 %v26
  %v40 = vunpack.c.l.b16 %v27
  %v41 = vunpack.c.l.b16 %v28
  %v42 = vunpack.c.l.b16 %v29
  %v43 = vpack.c.b16 %v40, %v39
  %v44 = vpack.c.b16 %v42, %v41
  %vm47 = vcmask 261120
  %v49 = vsel %vm47, %v34, 0
  %51 = vmatpush.bf16.msra.mxu0 0
  %52 = vmatpush.bf16.msra.mxu0 0
  %53 = vmatpush.bf16.msra.mxu0 0
  %54 = vmatpush.bf16.msra.mxu0 0
  %55 = vmatpush.bf16.msra.mxu0 0
  %56 = vmatpush.bf16.msra.mxu0 0
  %57 = vmatpush.bf16.msra.mxu0 %v44
  %58 = vmatpush.bf16.msra.mxu0 %v43
  %59 = vmatmul.bf16.gmra.mxu0 %v49
  %v60 = vpop.f32.mrf.mxu0
  %v61 = vadd.f32 0.0, %v60
  %v62 = vpop.f32.mrf.mxu0
  %v63 = vadd.f32 0.0, %v62
  %64 = vdwg.mxu0
  %v65 = vadd.f32 %v22, %v61
  %v66 = vadd.f32 %v23, %v63
  %vm67 = vcmask 785408
  %68 = vst.msk [vmem:[#allocation2] sm:$0xff] %vm67, %v65
  %69 = vst.msk [vmem:[#allocation2 + $0x8] sm:$0xff] %vm67, %v66
  // Predicated region
  $region18: #{model_forward.22} parent=0 // pred_check
    %p70 = pneg %p15
  $region19: #{model_forward.22} parent=0 // pred_check_branch
    %72 = sbr.rel (%p70) target = $region21
  $region20: #{model_forward.22} parent=0 // pred_region
    %v73 = vld [vmem:[#allocation2] sm:$0xff]
    %v74 = vld [vmem:[#allocation2 + $0x8] sm:$0xff]
    %v75 = vld [vmem:[%s2] sm:$0x1]
    %v77 = vperm.slane %v75, 0
    %v79 = vadd.f32 %v73, %v77
    %v80 = vadd.f32 %v74, %v77
    %v81 = vpack.c.bf16 %v79, %v79
    %v82 = vpack.c.bf16 %v80, %v80
    %vm83 = vcmask 781312
    %84 = vst.msk [vmem:[%s3] sm:$0xf] %vm83, %v81
    %85 = vst.msk [vmem:[%s3 + $0x4] sm:$0xf] %vm83, %v82
  $region21: #{model_forward.22} parent=0 // pred_fallthru
    _
  // Predicated region
  $region22: #{model_forward.22} parent=0 // pred_check
    _
  $region23: #{model_forward.22} parent=0 // pred_check_branch
    %87 = sbr.rel (0) target = $region25
  $region24: #{model_forward.22} parent=0 // pred_region
    _
  $region25: #{model_forward.22} parent=0 // pred_fallthru
    _
  // Predicated region
  $region26: #{model_forward.22} parent=0 // pred_check
    _
  $region27: #{model_forward.22} parent=0 // pred_check_branch
    %89 = sbr.rel (0) target = $region29
  $region28: #{model_forward.22} parent=0 // pred_region
    _
  $region29: #{model_forward.22} parent=0 // pred_fallthru
    _

// kernel: model_forward.24
$region0: #{model_forward.24}
  #allocation0 [shape = 'u32[]', space=smem, size = 0x4, offset = 0x4, fixed_abs, tag = 'smem constant byte address 0x4 - core index']
  #allocation1 [shape = 'u32[72,128]{1,0:T(1,128)}', space=vmem, size = 0x9000, scoped, tag = 'internal scratch']
  #allocation2 [shape = 'f32[16,32]{1,0:T(8,128)}', space=vmem, size = 0x2000, scoped, tag = 'scratch operand']
  %s0 = inlined_call_operand.vmem [shape: bf16[16,32], index: 0, kind: input, shape index: {}]
  %s1 = inlined_call_operand.vmem [shape: bf16[32,32], index: 1, kind: input, shape index: {}]
  %s2 = inlined_call_operand.vmem [shape: f32[1,32], index: 2, kind: input, shape index: {}]
  %s3 = inlined_call_operand.vmem [shape: bf16[16,32], index: 3, kind: input, shape index: {}]
  %s4 = inlined_call_operand.vmem [shape: f32[1,32], index: 4, kind: input, shape index: {}]
  %s5 = inlined_call_operand.vmem [shape: f32[1,32], index: 5, kind: input, shape index: {}]
  %s6 = inlined_call_operand.vmem [shape: bf16[16,32], index: 6, kind: output, shape index: {}]
  %s7 = sld [smem:[#allocation0]]
  $region42: #{model_forward.24} parent=0
    _
  %s9 = ssub.s32 1, %s7
  %s10 = scalar_select 0, %s9, %s7
  // Predicated region
  $region2: #{model_forward.24} parent=0 // pred_check
    _
  $region3: #{model_forward.24} parent=0 // pred_check_branch
    %12 = sbr.rel (0) target = $region5
  $region4: #{model_forward.24} parent=0 // pred_region
    _
  $region5: #{model_forward.24} parent=0 // pred_fallthru
    _
  // Predicated region
  $region6: #{model_forward.24} parent=0 // pred_check
    _
  $region7: #{model_forward.24} parent=0 // pred_check_branch
    %14 = sbr.rel (0) target = $region9
  $region8: #{model_forward.24} parent=0 // pred_region
    _
  $region9: #{model_forward.24} parent=0 // pred_fallthru
    _
  // Predicated region
  $region10: #{model_forward.24} parent=0 // pred_check
    _
  $region11: #{model_forward.24} parent=0 // pred_check_branch
    %16 = sbr.rel (0) target = $region13
  $region12: #{model_forward.24} parent=0 // pred_region
    _
  $region13: #{model_forward.24} parent=0 // pred_fallthru
    _
  // Predicated region
  $region14: #{model_forward.24} parent=0 // pred_check
    _
  $region15: #{model_forward.24} parent=0 // pred_check_branch
    %18 = sbr.rel (0) target = $region17
  $region16: #{model_forward.24} parent=0 // pred_region
    _
  $region17: #{model_forward.24} parent=0 // pred_fallthru
    _
  // Predicated region
  $region18: #{model_forward.24} parent=0 // pred_check
    _
  $region19: #{model_forward.24} parent=0 // pred_check_branch
    %20 = sbr.rel (0) target = $region21
  $region20: #{model_forward.24} parent=0 // pred_region
    _
  $region21: #{model_forward.24} parent=0 // pred_fallthru
    _
  // Predicated region
  $region22: #{model_forward.24} parent=0 // pred_check
    _
  $region23: #{model_forward.24} parent=0 // pred_check_branch
    %22 = sbr.rel (0) target = $region25
  $region24: #{model_forward.24} parent=0 // pred_region
    _
  $region25: #{model_forward.24} parent=0 // pred_fallthru
    _
  %p24 = scmp.eq.s32.totalorder 0, 0
  // Predicated region
  $region26: #{model_forward.24} parent=0 // pred_check
    %p25 = pneg %p24
  $region27: #{model_forward.24} parent=0 // pred_check_branch
    %27 = sbr.rel (%p25) target = $region29
  $region28: #{model_forward.24} parent=0 // pred_region
    %vm28 = vcmask 261120
    %29 = vst.msk [vmem:[#allocation2] sm:$0xff] %vm28, 0.0
    %30 = vst.msk [vmem:[#allocation2 + $0x8] sm:$0xff] %vm28, 0.0
  $region29: #{model_forward.24} parent=0 // pred_fallthru
    _
  %v31 = vld [vmem:[#allocation2] sm:$0xff]
  %v32 = vld [vmem:[#allocation2 + $0x8] sm:$0xff]
  %v33 = vld [vmem:[%s0] sm:$0xf]
  %v34 = vld [vmem:[%s0 + $0x4] sm:$0xf]
  %v35 = vld [vmem:[%s1] sm:$0xf]
  %v36 = vld [vmem:[%s1 + $0x4] sm:$0xf]
  %v37 = vld [vmem:[%s1 + $0x8] sm:$0xf]
  %v38 = vld [vmem:[%s1 + $0xc] sm:$0xf]
  %v41 = vunpack.c.l.b16 %v33
  %v42 = vunpack.c.l.b16 %v34
  %v43 = vpack.c.b16 %v42, %v41
  %v48 = vunpack.c.l.b16 %v35
  %v49 = vunpack.c.l.b16 %v36
  %v50 = vunpack.c.l.b16 %v37
  %v51 = vunpack.c.l.b16 %v38
  %v52 = vpack.c.b16 %v49, %v48
  %v53 = vpack.c.b16 %v51, %v50
  %vm56 = vcmask 261120
  %v58 = vsel %vm56, %v43, 0
  %60 = vmatpush.bf16.msra.mxu0 0
  %61 = vmatpush.bf16.msra.mxu0 0
  %62 = vmatpush.bf16.msra.mxu0 0
  %63 = vmatpush.bf16.msra.mxu0 0
  %64 = vmatpush.bf16.msra.mxu0 0
  %65 = vmatpush.bf16.msra.mxu0 0
  %66 = vmatpush.bf16.msra.mxu0 %v53
  %67 = vmatpush.bf16.msra.mxu0 %v52
  %68 = vmatmul.bf16.gmra.mxu0 %v58
  %v69 = vpop.f32.mrf.mxu0
  %v70 = vadd.f32 0.0, %v69
  %v71 = vpop.f32.mrf.mxu0
  %v72 = vadd.f32 0.0, %v71
  %73 = vdwg.mxu0
  %v74 = vadd.f32 %v31, %v70
  %v75 = vadd.f32 %v32, %v72
  %76 = vst.msk [vmem:[#allocation2] sm:$0xff] %vm56, %v74
  %77 = vst.msk [vmem:[#allocation2 + $0x8] sm:$0xff] %vm56, %v75
  // Predicated region
  $region30: #{model_forward.24} parent=0 // pred_check
    %p78 = pneg %p24
  $region31: #{model_forward.24} parent=0 // pred_check_branch
    %80 = sbr.rel (%p78) target = $region33
  $region32: #{model_forward.24} parent=0 // pred_region
    %v81 = vld [vmem:[#allocation2] sm:$0xff]
    %v82 = vld [vmem:[#allocation2 + $0x8] sm:$0xff]
    %v83 = vld [vmem:[%s2] sm:$0x1]
    %v85 = vperm.slane %v83, 0
    %v87 = vadd.f32 %v81, %v85
    %v88 = vadd.f32 %v82, %v85
    %v89 = vld [vmem:[%s3] sm:$0xf]
    %v90 = vld [vmem:[%s3 + $0x4] sm:$0xf]
    %v91 = vunpack.c.l.bf16 %v89
    %v92 = vunpack.c.l.bf16 %v90
    %v93 = vadd.f32 %v87, %v91
    %v94 = vadd.f32 %v88, %v92
    %v95 = vsel %vm56, %v93, 0.0
    %96 = vadd.xlane.f32.xlu0 %v95
    %v97 = vpop.xlane.xlu0 %96
    %v98 = vsel %vm56, %v94, 0.0
    %99 = vadd.xlane.f32.xlu0 %v98
    %v100 = vpop.xlane.xlu0 %99
    %v101 = vrcp.pop 32.0
    %v102 = vmul.f32 32.0, %v101
    %v103 = vsub.f32 1.0, %v102
    %v104 = vmul.f32 %v101, %v103
    %v105 = vadd.f32 %v101, %v104
    %vm106 = vweird.f32 %v101
    %v107 = vsel %vm106, %v101, %v105
    %v108 = vmul.f32 %v97, %v107
    %v109 = vmul.f32 %v100, %v107
    %v110 = vsub.f32 %v93, %v108
    %v111 = vsub.f32 %v94, %v109
    %v112 = vmul.f32 %v110, %v110
    %v113 = vmul.f32 %v111, %v111
    %v114 = vsel %vm56, %v112, 0.0
    %115 = vadd.xlane.f32.xlu0 %v114
    %v116 = vpop.xlane.xlu0 %115
    %v117 = vsel %vm56, %v113, 0.0
    %118 = vadd.xlane.f32.xlu0 %v117
    %v119 = vpop.xlane.xlu0 %118
    %v120 = vmul.f32 %v116, %v107
    %v121 = vmul.f32 %v119, %v107
    %v122 = vadd.f32 %v120, 1e-05
    %v123 = vadd.f32 %v121, 1e-05
    %v124 = vrsqrt.pop %v122
    %v125 = vmul.f32 %v124, %v122
    %v126 = vmul.f32 %v125, %v124
    %v127 = vmul.f32 0.5, %v126
    %v128 = vsub.f32 1.5, %v127
    %v129 = vmul.f32 %v124, %v128
    %vm130 = vweird.f32 %v122
    %vm131 = vweird.f32 %v124
    %vm132 = vmor %vm130, %vm131
    %v133 = vsel %vm132, %v124, %v129
    %v134 = vrsqrt.pop %v123
    %v135 = vmul.f32 %v134, %v123
    %v136 = vmul.f32 %v135, %v134
    %v137 = vmul.f32 0.5, %v136
    %v138 = vsub.f32 1.5, %v137
    %v139 = vmul.f32 %v134, %v138
    %vm140 = vweird.f32 %v123
    %vm141 = vweird.f32 %v134
    %vm142 = vmor %vm140, %vm141
    %v143 = vsel %vm142, %v134, %v139
    %v144 = vmul.f32 %v110, %v133
    %v145 = vmul.f32 %v111, %v143
    %v146 = vld [vmem:[%s4] sm:$0x1]
    %v148 = vperm.slane %v146, 0
    %v150 = vmul.f32 %v144, %v148
    %v151 = vmul.f32 %v145, %v148
    %v152 = vld [vmem:[%s5] sm:$0x1]
    %v154 = vperm.slane %v152, 0
    %v156 = vadd.f32 %v150, %v154
    %v157 = vadd.f32 %v151, %v154
    %v158 = vpack.c.bf16 %v156, %v156
    %v159 = vpack.c.bf16 %v157, %v157
    %vm160 = vcmask 257024
    %161 = vst.msk [vmem:[%s6] sm:$0xf] %vm160, %v158
    %162 = vst.msk [vmem:[%s6 + $0x4] sm:$0xf] %vm160, %v159
  $region33: #{model_forward.24} parent=0 // pred_fallthru
    _
  // Predicated region
  $region34: #{model_forward.24} parent=0 // pred_check
    _
  $region35: #{model_forward.24} parent=0 // pred_check_branch
    %164 = sbr.rel (0) target = $region37
  $region36: #{model_forward.24} parent=0 // pred_region
    _
  $region37: #{model_forward.24} parent=0 // pred_fallthru
    _
  // Predicated region
  $region38: #{model_forward.24} parent=0 // pred_check
    _
  $region39: #{model_forward.24} parent=0 // pred_check_branch
    %166 = sbr.rel (0) target = $region41
  $region40: #{model_forward.24} parent=0 // pred_region
    _
  $region41: #{model_forward.24} parent=0 // pred_fallthru
    _

// kernel: model_forward.25
$region0: #{model_forward.25}
  #allocation0 [shape = 'u32[]', space=smem, size = 0x4, offset = 0x4, fixed_abs, tag = 'smem constant byte address 0x4 - core index']
  #allocation1 [shape = 'u32[72,128]{1,0:T(1,128)}', space=vmem, size = 0x9000, scoped, tag = 'internal scratch']
  #allocation2 [shape = 'f32[16,64]{1,0:T(8,128)}', space=vmem, size = 0x2000, scoped, tag = 'scratch operand']
  %s0 = inlined_call_operand.vmem [shape: bf16[16,32], index: 0, kind: input, shape index: {}]
  %s1 = inlined_call_operand.vmem [shape: bf16[32,64], index: 1, kind: input, shape index: {}]
  %s2 = inlined_call_operand.vmem [shape: f32[1,64], index: 2, kind: input, shape index: {}]
  %s3 = inlined_call_operand.vmem [shape: bf16[16,64], index: 3, kind: output, shape index: {}]
  %s4 = sld [smem:[#allocation0]]
  $region30: #{model_forward.25} parent=0
    _
  %s6 = ssub.s32 1, %s4
  %s7 = scalar_select 0, %s6, %s4
  // Predicated region
  $region2: #{model_forward.25} parent=0 // pred_check
    _
  $region3: #{model_forward.25} parent=0 // pred_check_branch
    %9 = sbr.rel (0) target = $region5
  $region4: #{model_forward.25} parent=0 // pred_region
    _
  $region5: #{model_forward.25} parent=0 // pred_fallthru
    _
  // Predicated region
  $region6: #{model_forward.25} parent=0 // pred_check
    _
  $region7: #{model_forward.25} parent=0 // pred_check_branch
    %11 = sbr.rel (0) target = $region9
  $region8: #{model_forward.25} parent=0 // pred_region
    _
  $region9: #{model_forward.25} parent=0 // pred_fallthru
    _
  // Predicated region
  $region10: #{model_forward.25} parent=0 // pred_check
    _
  $region11: #{model_forward.25} parent=0 // pred_check_branch
    %13 = sbr.rel (0) target = $region13
  $region12: #{model_forward.25} parent=0 // pred_region
    _
  $region13: #{model_forward.25} parent=0 // pred_fallthru
    _
  %p15 = scmp.eq.s32.totalorder 0, 0
  // Predicated region
  $region14: #{model_forward.25} parent=0 // pred_check
    %p16 = pneg %p15
  $region15: #{model_forward.25} parent=0 // pred_check_branch
    %18 = sbr.rel (%p16) target = $region17
  $region16: #{model_forward.25} parent=0 // pred_region
    %vm19 = vcmask 523264
    %20 = vst.msk [vmem:[#allocation2] sm:$0xff] %vm19, 0.0
    %21 = vst.msk [vmem:[#allocation2 + $0x8] sm:$0xff] %vm19, 0.0
  $region17: #{model_forward.25} parent=0 // pred_fallthru
    _
  %v22 = vld [vmem:[#allocation2] sm:$0xff]
  %v23 = vld [vmem:[#allocation2 + $0x8] sm:$0xff]
  %v24 = vld [vmem:[%s0] sm:$0xf]
  %v25 = vld [vmem:[%s0 + $0x4] sm:$0xf]
  %v26 = vld [vmem:[%s1] sm:$0xf]
  %v27 = vld [vmem:[%s1 + $0x4] sm:$0xf]
  %v28 = vld [vmem:[%s1 + $0x8] sm:$0xf]
  %v29 = vld [vmem:[%s1 + $0xc] sm:$0xf]
  %v32 = vunpack.c.l.b16 %v24
  %v33 = vunpack.c.l.b16 %v25
  %v34 = vpack.c.b16 %v33, %v32
  %v39 = vunpack.c.l.b16 %v26
  %v40 = vunpack.c.l.b16 %v27
  %v41 = vunpack.c.l.b16 %v28
  %v42 = vunpack.c.l.b16 %v29
  %v43 = vpack.c.b16 %v40, %v39
  %v44 = vpack.c.b16 %v42, %v41
  %vm47 = vcmask 261120
  %v49 = vsel %vm47, %v34, 0
  %51 = vmatpush.bf16.msra.mxu0 0
  %52 = vmatpush.bf16.msra.mxu0 0
  %53 = vmatpush.bf16.msra.mxu0 0
  %54 = vmatpush.bf16.msra.mxu0 0
  %55 = vmatpush.bf16.msra.mxu0 0
  %56 = vmatpush.bf16.msra.mxu0 0
  %57 = vmatpush.bf16.msra.mxu0 %v44
  %58 = vmatpush.bf16.msra.mxu0 %v43
  %59 = vmatmul.bf16.gmra.mxu0 %v49
  %v60 = vpop.f32.mrf.mxu0
  %v61 = vadd.f32 0.0, %v60
  %v62 = vpop.f32.mrf.mxu0
  %v63 = vadd.f32 0.0, %v62
  %64 = vdwg.mxu0
  %v65 = vadd.f32 %v22, %v61
  %v66 = vadd.f32 %v23, %v63
  %vm67 = vcmask 523264
  %68 = vst.msk [vmem:[#allocation2] sm:$0xff] %vm67, %v65
  %69 = vst.msk [vmem:[#allocation2 + $0x8] sm:$0xff] %vm67, %v66
  // Predicated region
  $region18: #{model_forward.25} parent=0 // pred_check
    %p70 = pneg %p15
  $region19: #{model_forward.25} parent=0 // pred_check_branch
    %72 = sbr.rel (%p70) target = $region21
  $region20: #{model_forward.25} parent=0 // pred_region
    %v73 = vld [vmem:[#allocation2] sm:$0xff]
    %v74 = vld [vmem:[#allocation2 + $0x8] sm:$0xff]
    %v75 = vld [vmem:[%s2] sm:$0x1]
    %v77 = vperm.slane %v75, 0
    %v79 = vadd.f32 %v73, %v77
    %v80 = vadd.f32 %v74, %v77
    %v81 = vmul.f32 %v79, %v79
    %v82 = vmul.f32 %v80, %v80
    %v83 = vmul.f32 %v79, %v81
    %v84 = vmul.f32 %v80, %v82
    %v85 = vmul.f32 %v83, 0.044715
    %v86 = vmul.f32 %v84, 0.044715
    %v87 = vadd.f32 %v79, %v85
    %v88 = vadd.f32 %v80, %v86
    %v89 = vmul.f32 %v87, 0.7978846
    %v90 = vmul.f32 %v88, 0.7978846
    %v91 = vtanh.pop %v89
    %v92 = vtanh.pop %v90
    %v93 = vadd.f32 %v91, 1.0
    %v94 = vadd.f32 %v92, 1.0
    %v95 = vmul.f32 %v93, 0.5
    %v96 = vmul.f32 %v94, 0.5
    %v97 = vmul.f32 %v79, %v95
    %v98 = vmul.f32 %v80, %v96
    %v99 = vpack.c.bf16 %v97, %v97
    %v100 = vpack.c.bf16 %v98, %v98
    %vm101 = vcmask 519168
    %102 = vst.msk [vmem:[%s3] sm:$0xf] %vm101, %v99
    %103 = vst.msk [vmem:[%s3 + $0x4] sm:$0xf] %vm101, %v100
  $region21: #{model_forward.25} parent=0 // pred_fallthru
    _
  // Predicated region
  $region22: #{model_forward.25} parent=0 // pred_check
    _
  $region23: #{model_forward.25} parent=0 // pred_check_branch
    %105 = sbr.rel (0) target = $region25
  $region24: #{model_forward.25} parent=0 // pred_region
    _
  $region25: #{model_forward.25} parent=0 // pred_fallthru
    _
  // Predicated region
  $region26: #{model_forward.25} parent=0 // pred_check
    _
  $region27: #{model_forward.25} parent=0 // pred_check_branch
    %107 = sbr.rel (0) target = $region29
  $region28: #{model_forward.25} parent=0 // pred_region
    _
  $region29: #{model_forward.25} parent=0 // pred_fallthru
    _

// kernel: model_forward.26
$region0: #{model_forward.26}
  #allocation0 [shape = 'u32[]', space=smem, size = 0x4, offset = 0x4, fixed_abs, tag = 'smem constant byte address 0x4 - core index']
  #allocation1 [shape = 'u32[72,128]{1,0:T(1,128)}', space=vmem, size = 0x9000, scoped, tag = 'internal scratch']
  #allocation2 [shape = 'f32[16,32]{1,0:T(8,128)}', space=vmem, size = 0x2000, scoped, tag = 'scratch operand']
  %s0 = inlined_call_operand.vmem [shape: bf16[16,64], index: 0, kind: input, shape index: {}]
  %s1 = inlined_call_operand.vmem [shape: bf16[64,32], index: 1, kind: input, shape index: {}]
  %s2 = inlined_call_operand.vmem [shape: f32[1,32], index: 2, kind: input, shape index: {}]
  %s3 = inlined_call_operand.vmem [shape: bf16[16,32], index: 3, kind: input, shape index: {}]
  %s4 = inlined_call_operand.vmem [shape: f32[1,32], index: 4, kind: input, shape index: {}]
  %s5 = inlined_call_operand.vmem [shape: f32[1,32], index: 5, kind: input, shape index: {}]
  %s6 = inlined_call_operand.vmem [shape: bf16[16,32], index: 6, kind: output, shape index: {}]
  %s7 = sld [smem:[#allocation0]]
  $region42: #{model_forward.26} parent=0
    _
  %s9 = ssub.s32 1, %s7
  %s10 = scalar_select 0, %s9, %s7
  // Predicated region
  $region2: #{model_forward.26} parent=0 // pred_check
    _
  $region3: #{model_forward.26} parent=0 // pred_check_branch
    %12 = sbr.rel (0) target = $region5
  $region4: #{model_forward.26} parent=0 // pred_region
    _
  $region5: #{model_forward.26} parent=0 // pred_fallthru
    _
  // Predicated region
  $region6: #{model_forward.26} parent=0 // pred_check
    _
  $region7: #{model_forward.26} parent=0 // pred_check_branch
    %14 = sbr.rel (0) target = $region9
  $region8: #{model_forward.26} parent=0 // pred_region
    _
  $region9: #{model_forward.26} parent=0 // pred_fallthru
    _
  // Predicated region
  $region10: #{model_forward.26} parent=0 // pred_check
    _
  $region11: #{model_forward.26} parent=0 // pred_check_branch
    %16 = sbr.rel (0) target = $region13
  $region12: #{model_forward.26} parent=0 // pred_region
    _
  $region13: #{model_forward.26} parent=0 // pred_fallthru
    _
  // Predicated region
  $region14: #{model_forward.26} parent=0 // pred_check
    _
  $region15: #{model_forward.26} parent=0 // pred_check_branch
    %18 = sbr.rel (0) target = $region17
  $region16: #{model_forward.26} parent=0 // pred_region
    _
  $region17: #{model_forward.26} parent=0 // pred_fallthru
    _
  // Predicated region
  $region18: #{model_forward.26} parent=0 // pred_check
    _
  $region19: #{model_forward.26} parent=0 // pred_check_branch
    %20 = sbr.rel (0) target = $region21
  $region20: #{model_forward.26} parent=0 // pred_region
    _
  $region21: #{model_forward.26} parent=0 // pred_fallthru
    _
  // Predicated region
  $region22: #{model_forward.26} parent=0 // pred_check
    _
  $region23: #{model_forward.26} parent=0 // pred_check_branch
    %22 = sbr.rel (0) target = $region25
  $region24: #{model_forward.26} parent=0 // pred_region
    _
  $region25: #{model_forward.26} parent=0 // pred_fallthru
    _
  %p24 = scmp.eq.s32.totalorder 0, 0
  // Predicated region
  $region26: #{model_forward.26} parent=0 // pred_check
    %p25 = pneg %p24
  $region27: #{model_forward.26} parent=0 // pred_check_branch
    %27 = sbr.rel (%p25) target = $region29
  $region28: #{model_forward.26} parent=0 // pred_region
    %vm28 = vcmask 261120
    %29 = vst.msk [vmem:[#allocation2] sm:$0xff] %vm28, 0.0
    %30 = vst.msk [vmem:[#allocation2 + $0x8] sm:$0xff] %vm28, 0.0
  $region29: #{model_forward.26} parent=0 // pred_fallthru
    _
  %v31 = vld [vmem:[#allocation2] sm:$0xff]
  %v32 = vld [vmem:[#allocation2 + $0x8] sm:$0xff]
  %v33 = vld [vmem:[%s0] sm:$0xf]
  %v34 = vld [vmem:[%s0 + $0x4] sm:$0xf]
  %v35 = vld [vmem:[%s1] sm:$0xf]
  %v36 = vld [vmem:[%s1 + $0x4] sm:$0xf]
  %v37 = vld [vmem:[%s1 + $0x8] sm:$0xf]
  %v38 = vld [vmem:[%s1 + $0xc] sm:$0xf]
  %v39 = vld [vmem:[%s1 + $0x10] sm:$0xf]
  %v40 = vld [vmem:[%s1 + $0x14] sm:$0xf]
  %v41 = vld [vmem:[%s1 + $0x18] sm:$0xf]
  %v42 = vld [vmem:[%s1 + $0x1c] sm:$0xf]
  %v45 = vunpack.c.l.b16 %v33
  %v46 = vunpack.c.l.b16 %v34
  %v47 = vpack.c.b16 %v46, %v45
  %v56 = vunpack.c.l.b16 %v35
  %v57 = vunpack.c.l.b16 %v36
  %v58 = vunpack.c.l.b16 %v37
  %v59 = vunpack.c.l.b16 %v38
  %v60 = vunpack.c.l.b16 %v39
  %v61 = vunpack.c.l.b16 %v40
  %v62 = vunpack.c.l.b16 %v41
  %v63 = vunpack.c.l.b16 %v42
  %v64 = vpack.c.b16 %v57, %v56
  %v65 = vpack.c.b16 %v59, %v58
  %v66 = vpack.c.b16 %v61, %v60
  %v67 = vpack.c.b16 %v63, %v62
  %vm72 = vcmask 523264
  %v74 = vsel %vm72, %v47, 0
  %76 = vmatpush.bf16.msra.mxu0 0
  %77 = vmatpush.bf16.msra.mxu0 0
  %78 = vmatpush.bf16.msra.mxu0 0
  %79 = vmatpush.bf16.msra.mxu0 0
  %80 = vmatpush.bf16.msra.mxu0 %v67
  %81 = vmatpush.bf16.msra.mxu0 %v66
  %82 = vmatpush.bf16.msra.mxu0 %v65
  %83 = vmatpush.bf16.msra.mxu0 %v64
  %84 = vmatmul.bf16.gmra.mxu0 %v74
  %v85 = vpop.f32.mrf.mxu0
  %v86 = vadd.f32 0.0, %v85
  %v87 = vpop.f32.mrf.mxu0
  %v88 = vadd.f32 0.0, %v87
  %89 = vdwg.mxu0
  %v90 = vadd.f32 %v31, %v86
  %v91 = vadd.f32 %v32, %v88
  %vm92 = vcmask 261120
  %93 = vst.msk [vmem:[#allocation2] sm:$0xff] %vm92, %v90
  %94 = vst.msk [vmem:[#allocation2 + $0x8] sm:$0xff] %vm92, %v91
  // Predicated region
  $region30: #{model_forward.26} parent=0 // pred_check
    %p95 = pneg %p24
  $region31: #{model_forward.26} parent=0 // pred_check_branch
    %97 = sbr.rel (%p95) target = $region33
  $region32: #{model_forward.26} parent=0 // pred_region
    %v98 = vld [vmem:[#allocation2] sm:$0xff]
    %v99 = vld [vmem:[#allocation2 + $0x8] sm:$0xff]
    %v100 = vld [vmem:[%s2] sm:$0x1]
    %v102 = vperm.slane %v100, 0
    %v104 = vadd.f32 %v98, %v102
    %v105 = vadd.f32 %v99, %v102
    %v106 = vld [vmem:[%s3] sm:$0xf]
    %v107 = vld [vmem:[%s3 + $0x4] sm:$0xf]
    %v108 = vunpack.c.l.bf16 %v106
    %v109 = vunpack.c.l.bf16 %v107
    %v110 = vadd.f32 %v104, %v108
    %v111 = vadd.f32 %v105, %v109
    %v112 = vsel %vm92, %v110, 0.0
    %113 = vadd.xlane.f32.xlu0 %v112
    %v114 = vpop.xlane.xlu0 %113
    %v115 = vsel %vm92, %v111, 0.0
    %116 = vadd.xlane.f32.xlu0 %v115
    %v117 = vpop.xlane.xlu0 %116
    %v118 = vrcp.pop 32.0
    %v119 = vmul.f32 32.0, %v118
    %v120 = vsub.f32 1.0, %v119
    %v121 = vmul.f32 %v118, %v120
    %v122 = vadd.f32 %v118, %v121
    %vm123 = vweird.f32 %v118
    %v124 = vsel %vm123, %v118, %v122
    %v125 = vmul.f32 %v114, %v124
    %v126 = vmul.f32 %v117, %v124
    %v127 = vsub.f32 %v110, %v125
    %v128 = vsub.f32 %v111, %v126
    %v129 = vmul.f32 %v127, %v127
    %v130 = vmul.f32 %v128, %v128
    %v131 = vsel %vm92, %v129, 0.0
    %132 = vadd.xlane.f32.xlu0 %v131
    %v133 = vpop.xlane.xlu0 %132
    %v134 = vsel %vm92, %v130, 0.0
    %135 = vadd.xlane.f32.xlu0 %v134
    %v136 = vpop.xlane.xlu0 %135
    %v137 = vmul.f32 %v133, %v124
    %v138 = vmul.f32 %v136, %v124
    %v139 = vadd.f32 %v137, 1e-05
    %v140 = vadd.f32 %v138, 1e-05
    %v141 = vrsqrt.pop %v139
    %v142 = vmul.f32 %v141, %v139
    %v143 = vmul.f32 %v142, %v141
    %v144 = vmul.f32 0.5, %v143
    %v145 = vsub.f32 1.5, %v144
    %v146 = vmul.f32 %v141, %v145
    %vm147 = vweird.f32 %v139
    %vm148 = vweird.f32 %v141
    %vm149 = vmor %vm147, %vm148
    %v150 = vsel %vm149, %v141, %v146
    %v151 = vrsqrt.pop %v140
    %v152 = vmul.f32 %v151, %v140
    %v153 = vmul.f32 %v152, %v151
    %v154 = vmul.f32 0.5, %v153
    %v155 = vsub.f32 1.5, %v154
    %v156 = vmul.f32 %v151, %v155
    %vm157 = vweird.f32 %v140
    %vm158 = vweird.f32 %v151
    %vm159 = vmor %vm157, %vm158
    %v160 = vsel %vm159, %v151, %v156
    %v161 = vmul.f32 %v127, %v150
    %v162 = vmul.f32 %v128, %v160
    %v163 = vld [vmem:[%s4] sm:$0x1]
    %v165 = vperm.slane %v163, 0
    %v167 = vmul.f32 %v161, %v165
    %v168 = vmul.f32 %v162, %v165
    %v169 = vld [vmem:[%s5] sm:$0x1]
    %v171 = vperm.slane %v169, 0
    %v173 = vadd.f32 %v167, %v171
    %v174 = vadd.f32 %v168, %v171
    %v175 = vpack.c.bf16 %v173, %v173
    %v176 = vpack.c.bf16 %v174, %v174
    %vm177 = vcmask 257024
    %178 = vst.msk [vmem:[%s6] sm:$0xf] %vm177, %v175
    %179 = vst.msk [vmem:[%s6 + $0x4] sm:$0xf] %vm177, %v176
  $region33: #{model_forward.26} parent=0 // pred_fallthru
    _
  // Predicated region
  $region34: #{model_forward.26} parent=0 // pred_check
    _
  $region35: #{model_forward.26} parent=0 // pred_check_branch
    %181 = sbr.rel (0) target = $region37
  $region36: #{model_forward.26} parent=0 // pred_region
    _
  $region37: #{model_forward.26} parent=0 // pred_fallthru
    _
  // Predicated region
  $region38: #{model_forward.26} parent=0 // pred_check
    _
  $region39: #{model_forward.26} parent=0 // pred_check_branch
    %183 = sbr.rel (0) target = $region41
  $region40: #{model_forward.26} parent=0 // pred_region
    _
  $region41: #{model_forward.26} parent=0 // pred_fallthru
    _

</llo_original>
